<compile_context>
chip_gen: v6e
topology: v6e:2x2x1
jax: 0.10.0
libtpu: 0.0.40
codegen_flags: <defaults>
</compile_context>

<pallas_src>
import functools

import jax
import jax.numpy as jnp
from jax.experimental import pallas as pl
from jax.experimental.pallas import tpu as pltpu

LEAKY_SLOPE = 0.01   # nn.LeakyReLU() default
BN_EPS = 1e-5        # nn.BatchNorm2d default


def _round_up(x, m):
    return (x + m - 1) // m * m


# ---------------------------------------------------------------------------
# Fused kernel (one batch element per grid step).
#   x_ref  : (1, H, Ws, 2*Cin)  input, NHWC with even/odd pooled columns packed on lanes
#   w*_ref : (3, 3*Cin|3*Cout, Cout)  conv taps, [ky][kx*Cin + cin][cout], bf16
#   s*_ref : (1, Cout)  gamma / sqrt(var + eps)
#   b*_ref : (1, Cout)  scale*(conv_bias - mean) + beta
#   o_ref  : (1, L, Cout)  flat padded output slab, L = Hs*Wp (2 junk cols/row stripped in wrapper)
# Scratch im1/im2 hold kx-folded im2col slabs of the (zero-padded, row-major flattened)
# pooled image / conv1 activation:  im[r, kx*C:(kx+1)*C] == pad_flat[r + kx].
# ---------------------------------------------------------------------------
def _downblock_kernel(x_ref, w1_ref, s1_ref, b1_ref, w2_ref, s2_ref, b2_ref,
                      o_ref, im1, im2, *, Hs, Ws, Wp, Cin, Cout):
    L = Hs * Wp
    pad_rows = im1.shape[0]
    head = Wp + 1                      # rows [0, head) are top halo (+ left halo of row 1)
    tail = (Hs + 1) * Wp - 1           # rows [tail, pad_rows) are bottom halo region

    # --- zero only the halo borders (interiors fully overwritten below; junk cols are 0) ---
    im1[0:head, :] = jnp.zeros((head, 3 * Cin), jnp.float32)
    im1[tail:pad_rows, :] = jnp.zeros((pad_rows - tail, 3 * Cin), jnp.float32)
    im2[0:head, :] = jnp.zeros((head, 3 * Cout), jnp.float32)
    im2[tail:pad_rows, :] = jnp.zeros((pad_rows - tail, 3 * Cout), jnp.float32)

    # --- MaxPool2d(2): whole-slab, no strided / per-row ref indexing ---
    xi = x_ref[0]                                  # (H, Ws, 2*Cin) f32
    x4 = xi.reshape(Hs, 2, Ws, 2 * Cin)            # leading-dim split (layout preserving)
    hmax = jnp.maximum(x4[:, 0], x4[:, 1])         # max over row pairs      -> (Hs, Ws, 2*Cin)
    pooled = jnp.maximum(hmax[..., :Cin], hmax[..., Cin:])   # max over col pairs -> (Hs, Ws, Cin)

    # Padded flat slab value: row q = hs*Wp + c; columns >= Ws are zeros (they land on the
    # right halo / dead columns / next row's left halo when stored at offset Wp+1-kx).
    flat1 = jnp.concatenate(
        [pooled, jnp.zeros((Hs, Wp - Ws, Cin), jnp.float32)], axis=1).reshape(L, Cin)

    # kx-folded im2col stores: lane block kx of row r holds pad_flat[r + kx].
    for kx in range(3):
        im1[Wp + 1 - kx: Wp + 1 - kx + L, kx * Cin:(kx + 1) * Cin] = flat1

    def conv3x3(im_ref, w_ref, s_ref, b_ref):
        # 3 ky-dots over aligned (multiple-of-8) row offsets; bf16 operands, f32 accumulation.
        acc = None
        for ky in range(3):
            slab = im_ref[ky * Wp: ky * Wp + L, :].astype(jnp.bfloat16)
            d = jnp.dot(slab, w_ref[ky], preferred_element_type=jnp.float32)
            acc = d if acc is None else acc + d
        y = acc * s_ref[...] + b_ref[...]           # folded BN(eval) + conv bias
        return jnp.where(y >= 0.0, y, LEAKY_SLOPE * y)

    # --- conv1 + BN + LeakyReLU (+ Dropout = identity in eval mode) ---
    y1 = conv3x3(im1, w1_ref, s1_ref, b1_ref)       # (L, Cout) f32
    # TODO(synk): training-mode Dropout RNG masking not implemented (eval-mode identity).

    # Zero the junk columns so they double as the zero halo of conv2's im2col slab.
    col = jax.lax.broadcasted_iota(jnp.int32, (L, 1), 0) % Wp
    y1m = jnp.where(col < Ws, y1, 0.0)
    for kx in range(3):
        im2[Wp + 1 - kx: Wp + 1 - kx + L, kx * Cout:(kx + 1) * Cout] = y1m

    # --- conv2 + BN + LeakyReLU ---
    y2 = conv3x3(im2, w2_ref, s2_ref, b2_ref)       # (L, Cout) f32

    # Single whole-slab output store (junk columns stripped in the wrapper).
    o_ref[0] = y2.astype(o_ref.dtype)


# ---------------------------------------------------------------------------
# Wrapper: parameter folding + single fused pallas_call.
# ---------------------------------------------------------------------------
def downblock_forward(x_nchw, p):
    # TODO(synk): keep activations NHWC across chained DownBlocks to avoid this transpose.
    x = jnp.transpose(x_nchw, (0, 2, 3, 1))              # NCHW -> NHWC
    n, h, w, cin = x.shape
    hs, ws = h // 2, w // 2                              # MaxPool2d(2) floors odd dims
    x = x[:, : 2 * hs, : 2 * ws, :]
    h, w = 2 * hs, 2 * ws
    # FREE reshape: (W, C) -> (Ws, 2*C); even/odd columns of each pool pair sit on lanes.
    xr = x.reshape(n, h, ws, 2 * cin)

    cout = p["w1"].shape[0]
    wp = _round_up(ws + 2, 8)            # padded row width, rounded for aligned tap reads
    L = hs * wp
    pad_rows = (hs + 2) * wp

    def fold_bn(conv_b, gamma, beta, mean, var):
        scale = gamma / jnp.sqrt(var + BN_EPS)
        bias = scale * (conv_b - mean) + beta
        return (scale.reshape(1, cout).astype(jnp.float32),
                bias.reshape(1, cout).astype(jnp.float32))

    s1, b1 = fold_bn(p["b1"], p["gamma1"], p["beta1"], p["mean1"], p["var1"])
    s2, b2 = fold_bn(p["b2"], p["gamma2"], p["beta2"], p["mean2"], p["var2"])

    # (Cout, Cin, 3, 3) -> (ky, kx, cin, cout) -> (3, 3*Cin, Cout); row = kx*Cin + cin; bf16 for MXU.
    w1k = jnp.transpose(p["w1"], (2, 3, 1, 0)).reshape(3, 3 * cin, cout).astype(jnp.bfloat16)
    w2k = jnp.transpose(p["w2"], (2, 3, 1, 0)).reshape(3, 3 * cout, cout).astype(jnp.bfloat16)

    kernel = functools.partial(_downblock_kernel,
                               Hs=hs, Ws=ws, Wp=wp, Cin=cin, Cout=cout)

    # TODO(synk): add a row-tile grid axis (1-pooled-row halo) + per-step batch blocking for
    # large images / tiny batches; the per-step working set here is only a few tens of KiB.
    out = pl.pallas_call(
        kernel,
        out_shape=jax.ShapeDtypeStruct((n, L, cout), jnp.float32),
        grid_spec=pltpu.PrefetchScalarGridSpec(
            num_scalar_prefetch=0,
            grid=(n,),
            in_specs=[
                pl.BlockSpec((1, h, ws, 2 * cin), lambda i: (i, 0, 0, 0)),
                pl.BlockSpec((3, 3 * cin, cout), lambda i: (0, 0, 0)),
                pl.BlockSpec((1, cout), lambda i: (0, 0)),
                pl.BlockSpec((1, cout), lambda i: (0, 0)),
                pl.BlockSpec((3, 3 * cout, cout), lambda i: (0, 0, 0)),
                pl.BlockSpec((1, cout), lambda i: (0, 0)),
                pl.BlockSpec((1, cout), lambda i: (0, 0)),
            ],
            out_specs=pl.BlockSpec((1, L, cout), lambda i: (i, 0, 0)),
            scratch_shapes=[
                pltpu.VMEM((pad_rows, 3 * cin), jnp.float32),    # im2col of pooled input
                pltpu.VMEM((pad_rows, 3 * cout), jnp.float32),   # im2col of conv1 activation
            ],
        ),
        compiler_params=pltpu.CompilerParams(
            dimension_semantics=("parallel",),
            vmem_limit_bytes=32 * 1024 * 1024,   # explicit; generous vs. the small per-step working set
        ),
    )(xr, w1k, s1, b1, w2k, s2, b2)

    # Strip the (wp - ws) junk columns per row and return NCHW.
    out = out.reshape(n, hs, wp, cout)[:, :, :ws, :]
    return jnp.transpose(out, (0, 3, 1, 2))


# ---------------------------------------------------------------------------
# Deterministic parameter init + pure-JAX reference (correctness check only).
# ---------------------------------------------------------------------------
def init_downblock_params(key, in_ch, out_ch):
    ks = jax.random.split(key, 12)
    f32 = jnp.float32
    return {
        "w1": 0.1 * jax.random.normal(ks[0], (out_ch, in_ch, 3, 3), f32),
        "b1": 0.1 * jax.random.normal(ks[1], (out_ch,), f32),
        "gamma1": 1.0 + 0.1 * jax.random.normal(ks[2], (out_ch,), f32),
        "beta1": 0.1 * jax.random.normal(ks[3], (out_ch,), f32),
        "mean1": 0.1 * jax.random.normal(ks[4], (out_ch,), f32),
        "var1": 1.0 + 0.1 * jnp.abs(jax.random.normal(ks[5], (out_ch,), f32)),
        "w2": 0.1 * jax.random.normal(ks[6], (out_ch, out_ch, 3, 3), f32),
        "b2": 0.1 * jax.random.normal(ks[7], (out_ch,), f32),
        "gamma2": 1.0 + 0.1 * jax.random.normal(ks[8], (out_ch,), f32),
        "beta2": 0.1 * jax.random.normal(ks[9], (out_ch,), f32),
        "mean2": 0.1 * jax.random.normal(ks[10], (out_ch,), f32),
        "var2": 1.0 + 0.1 * jnp.abs(jax.random.normal(ks[11], (out_ch,), f32)),
    }


def _ref_forward(x_nchw, p):
    x = jnp.transpose(x_nchw, (0, 2, 3, 1))
    x = jnp.maximum(jnp.maximum(x[:, 0::2, 0::2, :], x[:, 1::2, 0::2, :]),
                    jnp.maximum(x[:, 0::2, 1::2, :], x[:, 1::2, 1::2, :]))

    def block(x, w, b, g, bt, m, v):
        y = jax.lax.conv_general_dilated(
            x, jnp.transpose(w, (2, 3, 1, 0)),
            window_strides=(1, 1), padding=((1, 1), (1, 1)),
            dimension_numbers=("NHWC", "HWIO", "NHWC"))
        y = y + b
        y = g * (y - m) / jnp.sqrt(v + BN_EPS) + bt
        return jnp.where(y >= 0.0, y, LEAKY_SLOPE * y)

    x = block(x, p["w1"], p["b1"], p["gamma1"], p["beta1"], p["mean1"], p["var1"])
    x = block(x, p["w2"], p["b2"], p["gamma2"], p["beta2"], p["mean2"], p["var2"])
    return jnp.transpose(x, (0, 3, 1, 2))


if __name__ == "__main__":
    key = jax.random.PRNGKey(0)
    k_x, k_p = jax.random.split(key)

    N, C_IN, C_OUT, H, W = 2, 4, 8, 16, 16
    x = jax.random.normal(k_x, (N, C_IN, H, W), jnp.float32)
    params = init_downblock_params(k_p, C_IN, C_OUT)

    out = jax.jit(downblock_forward)(x, params)
    out = jax.block_until_ready(out)
    assert out.shape == (N, C_OUT, H // 2, W // 2), out.shape

    ref = jax.block_until_ready(_ref_forward(x, params))
    err = float(jnp.max(jnp.abs(out - ref)))
    # bf16 MXU operands -> typical max-abs error ~1e-2; 5e-2 still catches structural bugs.
    assert err < 5e-2, f"max abs error too large: {err}"

    print("KERNEL_OK")
</pallas_src>

<mosaic_0001>
module attributes {stable_mosaic.version = 11 : i64} {
  func.func @_downblock_kernel(%arg0: i32, %arg1: memref<1x16x8x8xf32, #tpu.memory_space<vmem>>, %arg2: memref<3x12x8xbf16, #tpu.memory_space<vmem>>, %arg3: memref<1x8xf32, #tpu.memory_space<vmem>>, %arg4: memref<1x8xf32, #tpu.memory_space<vmem>>, %arg5: memref<3x24x8xbf16, #tpu.memory_space<vmem>>, %arg6: memref<1x8xf32, #tpu.memory_space<vmem>>, %arg7: memref<1x8xf32, #tpu.memory_space<vmem>>, %arg8: memref<1x128x8xf32, #tpu.memory_space<vmem>>, %arg9: memref<160x12xf32, #tpu.memory_space<vmem>>, %arg10: memref<160x24xf32, #tpu.memory_space<vmem>>) attributes {dimension_semantics = [#tpu.dimension_semantics<parallel>], iteration_bounds = array<i64: 2>, scalar_prefetch = 0 : i64, scratch_operands = 2 : i64, tpu.core_type = #tpu.core_type<tc>, window_params = [{transform_indices = @transform_0, window_bounds = array<i64: 1, 16, 8, 8>}, {pipeline_mode = #tpu.pipeline_mode<synchronous>, transform_indices = @transform_1, window_bounds = array<i64: 3, 12, 8>}, {pipeline_mode = #tpu.pipeline_mode<synchronous>, transform_indices = @transform_2, window_bounds = array<i64: 1, 8>}, {pipeline_mode = #tpu.pipeline_mode<synchronous>, transform_indices = @transform_3, window_bounds = array<i64: 1, 8>}, {pipeline_mode = #tpu.pipeline_mode<synchronous>, transform_indices = @transform_4, window_bounds = array<i64: 3, 24, 8>}, {pipeline_mode = #tpu.pipeline_mode<synchronous>, transform_indices = @transform_5, window_bounds = array<i64: 1, 8>}, {pipeline_mode = #tpu.pipeline_mode<synchronous>, transform_indices = @transform_6, window_bounds = array<i64: 1, 8>}, {transform_indices = @transform_7, window_bounds = array<i64: 1, 128, 8>}]} {
    %cst = arith.constant 0.000000e+00 : f32
    %0 = vector.broadcast %cst : f32 to vector<17x12xf32>
    %c0 = arith.constant 0 : index
    %c0_0 = arith.constant 0 : index
    %1 = vector.load %arg9[%c0, %c0_0] : memref<160x12xf32, #tpu.memory_space<vmem>>, vector<17x12xf32>
    tpu.vector_store %arg9[%c0, %c0_0], %0 {strides = array<i32>} : memref<160x12xf32, #tpu.memory_space<vmem>>, vector<17x12xf32>,
    %cst_1 = arith.constant 0.000000e+00 : f32
    %2 = vector.broadcast %cst_1 : f32 to vector<17x12xf32>
    %c143 = arith.constant 143 : index
    %c0_2 = arith.constant 0 : index
    %3 = vector.load %arg9[%c143, %c0_2] : memref<160x12xf32, #tpu.memory_space<vmem>>, vector<17x12xf32>
    tpu.vector_store %arg9[%c143, %c0_2], %2 {strides = array<i32>} : memref<160x12xf32, #tpu.memory_space<vmem>>, vector<17x12xf32>,
    %cst_3 = arith.constant 0.000000e+00 : f32
    %4 = vector.broadcast %cst_3 : f32 to vector<17x24xf32>
    %c0_4 = arith.constant 0 : index
    %c0_5 = arith.constant 0 : index
    %5 = vector.load %arg10[%c0_4, %c0_5] : memref<160x24xf32, #tpu.memory_space<vmem>>, vector<17x24xf32>
    tpu.vector_store %arg10[%c0_4, %c0_5], %4 {strides = array<i32>} : memref<160x24xf32, #tpu.memory_space<vmem>>, vector<17x24xf32>,
    %cst_6 = arith.constant 0.000000e+00 : f32
    %6 = vector.broadcast %cst_6 : f32 to vector<17x24xf32>
    %c143_7 = arith.constant 143 : index
    %c0_8 = arith.constant 0 : index
    %7 = vector.load %arg10[%c143_7, %c0_8] : memref<160x24xf32, #tpu.memory_space<vmem>>, vector<17x24xf32>
    tpu.vector_store %arg10[%c143_7, %c0_8], %6 {strides = array<i32>} : memref<160x24xf32, #tpu.memory_space<vmem>>, vector<17x24xf32>,
    %c0_9 = arith.constant 0 : index
    %c0_10 = arith.constant 0 : index
    %c0_11 = arith.constant 0 : index
    %c0_12 = arith.constant 0 : index
    %8 = vector.load %arg1[%c0_9, %c0_10, %c0_11, %c0_12] : memref<1x16x8x8xf32, #tpu.memory_space<vmem>>, vector<1x16x8x8xf32>
    %9 = vector.shape_cast %8 : vector<1x16x8x8xf32> to vector<16x8x8xf32>
    %10 = vector.shape_cast %9 : vector<16x8x8xf32> to vector<8x2x8x8xf32>
    %11 = vector.extract_strided_slice %10 {offsets = [0, 0, 0, 0], sizes = [8, 1, 8, 8], strides = [1, 1, 1, 1]} : vector<8x2x8x8xf32> to vector<8x1x8x8xf32>
    %12 = vector.shape_cast %11 : vector<8x1x8x8xf32> to vector<8x8x8xf32>
    %13 = vector.extract_strided_slice %10 {offsets = [0, 1, 0, 0], sizes = [8, 1, 8, 8], strides = [1, 1, 1, 1]} : vector<8x2x8x8xf32> to vector<8x1x8x8xf32>
    %14 = vector.shape_cast %13 : vector<8x1x8x8xf32> to vector<8x8x8xf32>
    %15 = arith.maximumf %12, %14 : vector<8x8x8xf32>
    %16 = vector.extract_strided_slice %15 {offsets = [0, 0, 0], sizes = [8, 8, 4], strides = [1, 1, 1]} : vector<8x8x8xf32> to vector<8x8x4xf32>
    %17 = vector.extract_strided_slice %15 {offsets = [0, 0, 4], sizes = [8, 8, 4], strides = [1, 1, 1]} : vector<8x8x8xf32> to vector<8x8x4xf32>
    %18 = arith.maximumf %16, %17 : vector<8x8x4xf32>
    %cst_13 = arith.constant 0.000000e+00 : f32
    %19 = vector.broadcast %cst_13 : f32 to vector<8x8x4xf32>
    %20 = tpu.concatenate %18, %19 in 1 : vector<8x8x4xf32>, vector<8x8x4xf32> -> vector<8x16x4xf32>
    %21 = vector.shape_cast %20 : vector<8x16x4xf32> to vector<128x4xf32>
    %c17 = arith.constant 17 : index
    %c0_14 = arith.constant 0 : index
    %22 = vector.load %arg9[%c17, %c0_14] : memref<160x12xf32, #tpu.memory_space<vmem>>, vector<128x4xf32>
    tpu.vector_store %arg9[%c17, %c0_14], %21 {strides = array<i32>} : memref<160x12xf32, #tpu.memory_space<vmem>>, vector<128x4xf32>,
    %c16 = arith.constant 16 : index
    %c4 = arith.constant 4 : index
    %23 = vector.load %arg9[%c16, %c4] : memref<160x12xf32, #tpu.memory_space<vmem>>, vector<128x4xf32>
    tpu.vector_store %arg9[%c16, %c4], %21 {strides = array<i32>} : memref<160x12xf32, #tpu.memory_space<vmem>>, vector<128x4xf32>,
    %c15 = arith.constant 15 : index
    %c8 = arith.constant 8 : index
    %24 = vector.load %arg9[%c15, %c8] : memref<160x12xf32, #tpu.memory_space<vmem>>, vector<128x4xf32>
    tpu.vector_store %arg9[%c15, %c8], %21 {strides = array<i32>} : memref<160x12xf32, #tpu.memory_space<vmem>>, vector<128x4xf32>,
    %c0_15 = arith.constant 0 : index
    %c0_16 = arith.constant 0 : index
    %25 = vector.load %arg9[%c0_15, %c0_16] : memref<160x12xf32, #tpu.memory_space<vmem>>, vector<128x12xf32>
    %26 = arith.truncf %25 : vector<128x12xf32> to vector<128x12xbf16>
    %c0_17 = arith.constant 0 : index
    %c0_18 = arith.constant 0 : index
    %c0_19 = arith.constant 0 : index
    %27 = vector.load %arg2[%c0_17, %c0_18, %c0_19] : memref<3x12x8xbf16, #tpu.memory_space<vmem>>, vector<1x12x8xbf16>
    %28 = vector.shape_cast %27 : vector<1x12x8xbf16> to vector<12x8xbf16>
    %cst_20 = arith.constant dense<0.000000e+00> : vector<128x8xf32>
    %29 = tpu.matmul %26, %28, %cst_20 {dimension_numbers = #tpu.dot_dimension_numbers<[1], [0], [0], [1], [0, 0, 1, 1], [], []>} : vector<128x12xbf16>, vector<12x8xbf16>, vector<128x8xf32> -> vector<128x8xf32>
    %c16_21 = arith.constant 16 : index
    %c0_22 = arith.constant 0 : index
    %30 = vector.load %arg9[%c16_21, %c0_22] : memref<160x12xf32, #tpu.memory_space<vmem>>, vector<128x12xf32>
    %31 = arith.truncf %30 : vector<128x12xf32> to vector<128x12xbf16>
    %c1 = arith.constant 1 : index
    %c0_23 = arith.constant 0 : index
    %c0_24 = arith.constant 0 : index
    %32 = vector.load %arg2[%c1, %c0_23, %c0_24] : memref<3x12x8xbf16, #tpu.memory_space<vmem>>, vector<1x12x8xbf16>
    %33 = vector.shape_cast %32 : vector<1x12x8xbf16> to vector<12x8xbf16>
    %cst_25 = arith.constant dense<0.000000e+00> : vector<128x8xf32>
    %34 = tpu.matmul %31, %33, %cst_25 {dimension_numbers = #tpu.dot_dimension_numbers<[1], [0], [0], [1], [0, 0, 1, 1], [], []>} : vector<128x12xbf16>, vector<12x8xbf16>, vector<128x8xf32> -> vector<128x8xf32>
    %35 = arith.addf %29, %34 : vector<128x8xf32>
    %c32 = arith.constant 32 : index
    %c0_26 = arith.constant 0 : index
    %36 = vector.load %arg9[%c32, %c0_26] : memref<160x12xf32, #tpu.memory_space<vmem>>, vector<128x12xf32>
    %37 = arith.truncf %36 : vector<128x12xf32> to vector<128x12xbf16>
    %c2 = arith.constant 2 : index
    %c0_27 = arith.constant 0 : index
    %c0_28 = arith.constant 0 : index
    %38 = vector.load %arg2[%c2, %c0_27, %c0_28] : memref<3x12x8xbf16, #tpu.memory_space<vmem>>, vector<1x12x8xbf16>
    %39 = vector.shape_cast %38 : vector<1x12x8xbf16> to vector<12x8xbf16>
    %cst_29 = arith.constant dense<0.000000e+00> : vector<128x8xf32>
    %40 = tpu.matmul %37, %39, %cst_29 {dimension_numbers = #tpu.dot_dimension_numbers<[1], [0], [0], [1], [0, 0, 1, 1], [], []>} : vector<128x12xbf16>, vector<12x8xbf16>, vector<128x8xf32> -> vector<128x8xf32>
    %41 = arith.addf %35, %40 : vector<128x8xf32>
    %c0_30 = arith.constant 0 : index
    %c0_31 = arith.constant 0 : index
    %42 = vector.load %arg3[%c0_30, %c0_31] : memref<1x8xf32, #tpu.memory_space<vmem>>, vector<1x8xf32>
    %43 = vector.broadcast %42 : vector<1x8xf32> to vector<128x8xf32>
    %44 = arith.mulf %41, %43 : vector<128x8xf32>
    %c0_32 = arith.constant 0 : index
    %c0_33 = arith.constant 0 : index
    %45 = vector.load %arg4[%c0_32, %c0_33] : memref<1x8xf32, #tpu.memory_space<vmem>>, vector<1x8xf32>
    %46 = vector.broadcast %45 : vector<1x8xf32> to vector<128x8xf32>
    %47 = arith.addf %44, %46 : vector<128x8xf32>
    %cst_34 = arith.constant 0.000000e+00 : f32
    %48 = vector.broadcast %cst_34 : f32 to vector<128x8xf32>
    %49 = arith.cmpf oge, %47, %48 : vector<128x8xf32>
    %cst_35 = arith.constant 0.00999999977 : f32
    %50 = vector.broadcast %cst_35 : f32 to vector<128x8xf32>
    %51 = arith.mulf %50, %47 : vector<128x8xf32>
    %52 = arith.select %49, %47, %51 : vector<128x8xi1>, vector<128x8xf32>
    %53 = tpu.iota {dimensions = array<i32: 0>} : vector<128x1xi32>
    %c16_i32 = arith.constant 16 : i32
    %c0_i32 = arith.constant 0 : i32
    %54 = arith.cmpi eq, %c16_i32, %c0_i32 : i32
    %c1_i32 = arith.constant 1 : i32
    %55 = arith.select %54, %c1_i32, %c16_i32 : i32
    %56 = vector.broadcast %55 : i32 to vector<128x1xi32>
    %57 = arith.remsi %53, %56 : vector<128x1xi32>
    %c0_i32_36 = arith.constant 0 : i32
    %58 = vector.broadcast %c0_i32_36 : i32 to vector<128x1xi32>
    %59 = arith.cmpi ne, %57, %58 : vector<128x1xi32>
    %c0_i32_37 = arith.constant 0 : i32
    %60 = vector.broadcast %c0_i32_37 : i32 to vector<128x1xi32>
    %61 = arith.cmpi slt, %57, %60 : vector<128x1xi32>
    %c0_i32_38 = arith.constant 0 : i32
    %62 = arith.cmpi slt, %55, %c0_i32_38 : i32
    %63 = vector.broadcast %62 : i1 to vector<128x1xi1>
    %64 = vector.broadcast %63 : vector<128x1xi1> to vector<128x1xi1>
    %65 = arith.xori %61, %64 : vector<128x1xi1>
    %66 = arith.andi %65, %59 : vector<128x1xi1>
    %67 = vector.broadcast %55 : i32 to vector<128x1xi32>
    %68 = arith.addi %57, %67 : vector<128x1xi32>
    %69 = arith.select %66, %68, %57 : vector<128x1xi1>, vector<128x1xi32>
    %c8_i32 = arith.constant 8 : i32
    %70 = vector.broadcast %c8_i32 : i32 to vector<128x1xi32>
    %71 = arith.cmpi slt, %69, %70 : vector<128x1xi32>
    %cst_39 = arith.constant 0.000000e+00 : f32
    %72 = vector.shape_cast %71 : vector<128x1xi1> to vector<128x1xi1>
    %73 = vector.broadcast %72 : vector<128x1xi1> to vector<128x8xi1>
    %74 = vector.broadcast %cst_39 : f32 to vector<128x8xf32>
    %75 = arith.select %73, %52, %74 : vector<128x8xi1>, vector<128x8xf32>
    %c17_40 = arith.constant 17 : index
    %c0_41 = arith.constant 0 : index
    %76 = vector.load %arg10[%c17_40, %c0_41] : memref<160x24xf32, #tpu.memory_space<vmem>>, vector<128x8xf32>
    tpu.vector_store %arg10[%c17_40, %c0_41], %75 {strides = array<i32>} : memref<160x24xf32, #tpu.memory_space<vmem>>, vector<128x8xf32>,
    %c16_42 = arith.constant 16 : index
    %c8_43 = arith.constant 8 : index
    %77 = vector.load %arg10[%c16_42, %c8_43] : memref<160x24xf32, #tpu.memory_space<vmem>>, vector<128x8xf32>
    tpu.vector_store %arg10[%c16_42, %c8_43], %75 {strides = array<i32>} : memref<160x24xf32, #tpu.memory_space<vmem>>, vector<128x8xf32>,
    %c15_44 = arith.constant 15 : index
    %c16_45 = arith.constant 16 : index
    %78 = vector.load %arg10[%c15_44, %c16_45] : memref<160x24xf32, #tpu.memory_space<vmem>>, vector<128x8xf32>
    tpu.vector_store %arg10[%c15_44, %c16_45], %75 {strides = array<i32>} : memref<160x24xf32, #tpu.memory_space<vmem>>, vector<128x8xf32>,
    %c0_46 = arith.constant 0 : index
    %c0_47 = arith.constant 0 : index
    %79 = vector.load %arg10[%c0_46, %c0_47] : memref<160x24xf32, #tpu.memory_space<vmem>>, vector<128x24xf32>
    %80 = arith.truncf %79 : vector<128x24xf32> to vector<128x24xbf16>
    %c0_48 = arith.constant 0 : index
    %c0_49 = arith.constant 0 : index
    %c0_50 = arith.constant 0 : index
    %81 = vector.load %arg5[%c0_48, %c0_49, %c0_50] : memref<3x24x8xbf16, #tpu.memory_space<vmem>>, vector<1x24x8xbf16>
    %82 = vector.shape_cast %81 : vector<1x24x8xbf16> to vector<24x8xbf16>
    %cst_51 = arith.constant dense<0.000000e+00> : vector<128x8xf32>
    %83 = tpu.matmul %80, %82, %cst_51 {dimension_numbers = #tpu.dot_dimension_numbers<[1], [0], [0], [1], [0, 0, 1, 1], [], []>} : vector<128x24xbf16>, vector<24x8xbf16>, vector<128x8xf32> -> vector<128x8xf32>
    %c16_52 = arith.constant 16 : index
    %c0_53 = arith.constant 0 : index
    %84 = vector.load %arg10[%c16_52, %c0_53] : memref<160x24xf32, #tpu.memory_space<vmem>>, vector<128x24xf32>
    %85 = arith.truncf %84 : vector<128x24xf32> to vector<128x24xbf16>
    %c1_54 = arith.constant 1 : index
    %c0_55 = arith.constant 0 : index
    %c0_56 = arith.constant 0 : index
    %86 = vector.load %arg5[%c1_54, %c0_55, %c0_56] : memref<3x24x8xbf16, #tpu.memory_space<vmem>>, vector<1x24x8xbf16>
    %87 = vector.shape_cast %86 : vector<1x24x8xbf16> to vector<24x8xbf16>
    %cst_57 = arith.constant dense<0.000000e+00> : vector<128x8xf32>
    %88 = tpu.matmul %85, %87, %cst_57 {dimension_numbers = #tpu.dot_dimension_numbers<[1], [0], [0], [1], [0, 0, 1, 1], [], []>} : vector<128x24xbf16>, vector<24x8xbf16>, vector<128x8xf32> -> vector<128x8xf32>
    %89 = arith.addf %83, %88 : vector<128x8xf32>
    %c32_58 = arith.constant 32 : index
    %c0_59 = arith.constant 0 : index
    %90 = vector.load %arg10[%c32_58, %c0_59] : memref<160x24xf32, #tpu.memory_space<vmem>>, vector<128x24xf32>
    %91 = arith.truncf %90 : vector<128x24xf32> to vector<128x24xbf16>
    %c2_60 = arith.constant 2 : index
    %c0_61 = arith.constant 0 : index
    %c0_62 = arith.constant 0 : index
    %92 = vector.load %arg5[%c2_60, %c0_61, %c0_62] : memref<3x24x8xbf16, #tpu.memory_space<vmem>>, vector<1x24x8xbf16>
    %93 = vector.shape_cast %92 : vector<1x24x8xbf16> to vector<24x8xbf16>
    %cst_63 = arith.constant dense<0.000000e+00> : vector<128x8xf32>
    %94 = tpu.matmul %91, %93, %cst_63 {dimension_numbers = #tpu.dot_dimension_numbers<[1], [0], [0], [1], [0, 0, 1, 1], [], []>} : vector<128x24xbf16>, vector<24x8xbf16>, vector<128x8xf32> -> vector<128x8xf32>
    %95 = arith.addf %89, %94 : vector<128x8xf32>
    %c0_64 = arith.constant 0 : index
    %c0_65 = arith.constant 0 : index
    %96 = vector.load %arg6[%c0_64, %c0_65] : memref<1x8xf32, #tpu.memory_space<vmem>>, vector<1x8xf32>
    %97 = vector.broadcast %96 : vector<1x8xf32> to vector<128x8xf32>
    %98 = arith.mulf %95, %97 : vector<128x8xf32>
    %c0_66 = arith.constant 0 : index
    %c0_67 = arith.constant 0 : index
    %99 = vector.load %arg7[%c0_66, %c0_67] : memref<1x8xf32, #tpu.memory_space<vmem>>, vector<1x8xf32>
    %100 = vector.broadcast %99 : vector<1x8xf32> to vector<128x8xf32>
    %101 = arith.addf %98, %100 : vector<128x8xf32>
    %cst_68 = arith.constant 0.000000e+00 : f32
    %102 = vector.broadcast %cst_68 : f32 to vector<128x8xf32>
    %103 = arith.cmpf oge, %101, %102 : vector<128x8xf32>
    %cst_69 = arith.constant 0.00999999977 : f32
    %104 = vector.broadcast %cst_69 : f32 to vector<128x8xf32>
    %105 = arith.mulf %104, %101 : vector<128x8xf32>
    %106 = arith.select %103, %101, %105 : vector<128x8xi1>, vector<128x8xf32>
    %c0_70 = arith.constant 0 : index
    %c0_71 = arith.constant 0 : index
    %c0_72 = arith.constant 0 : index
    %107 = vector.load %arg8[%c0_70, %c0_71, %c0_72] : memref<1x128x8xf32, #tpu.memory_space<vmem>>, vector<1x128x8xf32>
    %108 = vector.shape_cast %107 : vector<1x128x8xf32> to vector<128x8xf32>
    %109 = vector.shape_cast %106 : vector<128x8xf32> to vector<1x128x8xf32>
    tpu.vector_store %arg8[%c0_70, %c0_71, %c0_72], %109 {strides = array<i32>} : memref<1x128x8xf32, #tpu.memory_space<vmem>>, vector<1x128x8xf32>,
    return
  }
  func.func @transform_0(%arg0: i32) -> (i32, i32, i32, i32) {
    %c0_i32 = arith.constant 0 : i32
    %c0_i32_0 = arith.constant 0 : i32
    %c0_i32_1 = arith.constant 0 : i32
    %c0_i32_2 = arith.constant 0 : i32
    return %arg0, %c0_i32, %c0_i32_0, %c0_i32_1 : i32, i32, i32, i32
  }
  func.func @transform_1(%arg0: i32) -> (i32, i32, i32) {
    %c0_i32 = arith.constant 0 : i32
    %c0_i32_0 = arith.constant 0 : i32
    %c0_i32_1 = arith.constant 0 : i32
    %c0_i32_2 = arith.constant 0 : i32
    return %c0_i32, %c0_i32_0, %c0_i32_1 : i32, i32, i32
  }
  func.func @transform_2(%arg0: i32) -> (i32, i32) {
    %c0_i32 = arith.constant 0 : i32
    %c0_i32_0 = arith.constant 0 : i32
    %c0_i32_1 = arith.constant 0 : i32
    return %c0_i32, %c0_i32_0 : i32, i32
  }
  func.func @transform_3(%arg0: i32) -> (i32, i32) {
    %c0_i32 = arith.constant 0 : i32
    %c0_i32_0 = arith.constant 0 : i32
    %c0_i32_1 = arith.constant 0 : i32
    return %c0_i32, %c0_i32_0 : i32, i32
  }
  func.func @transform_4(%arg0: i32) -> (i32, i32, i32) {
    %c0_i32 = arith.constant 0 : i32
    %c0_i32_0 = arith.constant 0 : i32
    %c0_i32_1 = arith.constant 0 : i32
    %c0_i32_2 = arith.constant 0 : i32
    return %c0_i32, %c0_i32_0, %c0_i32_1 : i32, i32, i32
  }
  func.func @transform_5(%arg0: i32) -> (i32, i32) {
    %c0_i32 = arith.constant 0 : i32
    %c0_i32_0 = arith.constant 0 : i32
    %c0_i32_1 = arith.constant 0 : i32
    return %c0_i32, %c0_i32_0 : i32, i32
  }
  func.func @transform_6(%arg0: i32) -> (i32, i32) {
    %c0_i32 = arith.constant 0 : i32
    %c0_i32_0 = arith.constant 0 : i32
    %c0_i32_1 = arith.constant 0 : i32
    return %c0_i32, %c0_i32_0 : i32, i32
  }
  func.func @transform_7(%arg0: i32) -> (i32, i32, i32) {
    %c0_i32 = arith.constant 0 : i32
    %c0_i32_0 = arith.constant 0 : i32
    %c0_i32_1 = arith.constant 0 : i32
    return %arg0, %c0_i32, %c0_i32_0 : i32, i32, i32
  }
}

</mosaic_0001>

<llo_original>
// kernel: downblock_forward.1
$region0: #{downblock_forward.1}
  #allocation0 [shape = 'u32[]', space=smem, size = 0x4, offset = 0x4, fixed_abs, tag = 'smem constant byte address 0x4 - core index']
  #allocation1 [shape = 'u32[144,128]{1,0:T(1,128)}', space=vmem, size = 0x12000, scoped, tag = 'internal scratch']
  #allocation2 [shape = 'f32[160,12]{1,0:T(8,128)}', space=vmem, size = 0x14000, scoped, tag = 'scratch operand']
  #allocation3 [shape = 'f32[160,24]{1,0:T(8,128)}', space=vmem, size = 0x14000, scoped, tag = 'scratch operand']
  %s0 = inlined_call_operand.vmem [shape: f32[2,16,8,8], index: 0, kind: input, shape index: {}]
  %s1 = inlined_call_operand.vmem [shape: bf16[3,12,8], index: 1, kind: input, shape index: {}]
  %s2 = inlined_call_operand.vmem [shape: f32[1,8], index: 2, kind: input, shape index: {}]
  %s3 = inlined_call_operand.vmem [shape: f32[1,8], index: 3, kind: input, shape index: {}]
  %s4 = inlined_call_operand.vmem [shape: bf16[3,24,8], index: 4, kind: input, shape index: {}]
  %s5 = inlined_call_operand.vmem [shape: f32[1,8], index: 5, kind: input, shape index: {}]
  %s6 = inlined_call_operand.vmem [shape: f32[1,8], index: 6, kind: input, shape index: {}]
  %s7 = inlined_call_operand.vmem [shape: f32[2,128,8], index: 7, kind: output, shape index: {}]
  %s8 = sld [smem:[#allocation0]]
  $region61: #{downblock_forward.1} parent=0
    _
  %s10 = ssub.s32 1, %s8
  %s11 = scalar_select 0, %s10, %s8
  loop: start=0, step=1, limit=4
  $region2: #{downblock_forward.1} parent=0 // loop_pre_header
    _
  $region3: #{downblock_forward.1} parent=0 // loop_header
    %s13 = sphi 0, %s17
    %p14 = scmp.ge.s32.totalorder %s13, 4
    %s23 = sphi 0, %s25
    %s26 = sphi 0, %s23
    %s27 = sphi 0, %s26
    %s43 = sphi 0, %s27
    %s47 = sphi 0, %s47
    %s49 = sphi 0, %s47
    %s50 = sphi 0, %s49
    %s64 = sphi 0, %s50
    %s68 = sphi 0, %s68
    %s70 = sphi 0, %s68
    %s71 = sphi 0, %s70
    %s85 = sphi 0, %s71
    %s89 = sphi 0, %s89
    %s91 = sphi 0, %s89
    %s92 = sphi 0, %s91
    %s106 = sphi 0, %s92
    %s110 = sphi 0, %s110
    %s112 = sphi 0, %s110
    %s113 = sphi 0, %s112
    %s127 = sphi 0, %s113
    %s131 = sphi 0, %s131
    %s133 = sphi 0, %s131
    %s134 = sphi 0, %s133
    %s148 = sphi 0, %s134
    %s152 = sphi 0, %s152
    %s154 = sphi 0, %s152
    %s155 = sphi 0, %s154
    %s169 = sphi 0, %s155
    %s175 = sphi 0, %s177
    %s178 = sphi 0, %s175
    %s179 = sphi 0, %s178
    %s195 = sphi 0, %s179
  $region4: #{downblock_forward.1} parent=0 // loop_header_branch
    %16 = sbr.rel (%p14) target = $region8
  $region5: #{downblock_forward.1} parent=0 // loop_body
    %s18 = ssub.s32 %s13, 1
    %s19 = ssub.s32 %s13, 2
    %s20 = sadd.s32 %s13, 1
    %s21 = ssub.s32 %s13, %s20
    %p22 = scmp.eq.s32.totalorder %s21, 0
    %s24 = sadd.s32 %s23, 1
    %s25 = scalar_select %p22, %s23, %s24
    %p28 = pneg %p22
    %p29 = scmp.eq.s32.totalorder %s13, 1
    %p30 = por %p28, %p29
    %p31 = scmp.ne.s32.totalorder %s23, %s26
    %p32 = scmp.eq.s32.totalorder %s13, 0
    %p33 = por %p31, %p32
    %p34 = scmp.ne.s32.totalorder %s23, %s26
    %p35 = scmp.eq.s32.totalorder %s18, 1
    %p36 = por %p34, %p35
    %p37 = scmp.ne.s32.totalorder %s26, %s27
    %p38 = scmp.eq.s32.totalorder %s18, 0
    %p39 = por %p37, %p38
    %p40 = scmp.ne.s32.totalorder %s26, %s27
    %p41 = scmp.eq.s32.totalorder %s19, 1
    %p42 = por %p40, %p41
    %p44 = scmp.ne.s32.totalorder %s27, %s43
    %p45 = scmp.eq.s32.totalorder %s19, 0
    %p46 = por %p44, %p45
    %s48 = sadd.s32 %s47, 1
    %p51 = scmp.eq.s32.totalorder %s13, 1
    %p52 = scmp.ne.s32.totalorder %s47, %s49
    %p53 = scmp.eq.s32.totalorder %s13, 0
    %p54 = por %p52, %p53
    %p55 = scmp.ne.s32.totalorder %s47, %s49
    %p56 = scmp.eq.s32.totalorder %s18, 1
    %p57 = por %p55, %p56
    %p58 = scmp.ne.s32.totalorder %s49, %s50
    %p59 = scmp.eq.s32.totalorder %s18, 0
    %p60 = por %p58, %p59
    %p61 = scmp.ne.s32.totalorder %s49, %s50
    %p62 = scmp.eq.s32.totalorder %s19, 1
    %p63 = por %p61, %p62
    %p65 = scmp.ne.s32.totalorder %s50, %s64
    %p66 = scmp.eq.s32.totalorder %s19, 0
    %p67 = por %p65, %p66
    %s69 = sadd.s32 %s68, 1
    %p72 = scmp.eq.s32.totalorder %s13, 1
    %p73 = scmp.ne.s32.totalorder %s68, %s70
    %p74 = scmp.eq.s32.totalorder %s13, 0
    %p75 = por %p73, %p74
    %p76 = scmp.ne.s32.totalorder %s68, %s70
    %p77 = scmp.eq.s32.totalorder %s18, 1
    %p78 = por %p76, %p77
    %p79 = scmp.ne.s32.totalorder %s70, %s71
    %p80 = scmp.eq.s32.totalorder %s18, 0
    %p81 = por %p79, %p80
    %p82 = scmp.ne.s32.totalorder %s70, %s71
    %p83 = scmp.eq.s32.totalorder %s19, 1
    %p84 = por %p82, %p83
    %p86 = scmp.ne.s32.totalorder %s71, %s85
    %p87 = scmp.eq.s32.totalorder %s19, 0
    %p88 = por %p86, %p87
    %s90 = sadd.s32 %s89, 1
    %p93 = scmp.eq.s32.totalorder %s13, 1
    %p94 = scmp.ne.s32.totalorder %s89, %s91
    %p95 = scmp.eq.s32.totalorder %s13, 0
    %p96 = por %p94, %p95
    %p97 = scmp.ne.s32.totalorder %s89, %s91
    %p98 = scmp.eq.s32.totalorder %s18, 1
    %p99 = por %p97, %p98
    %p100 = scmp.ne.s32.totalorder %s91, %s92
    %p101 = scmp.eq.s32.totalorder %s18, 0
    %p102 = por %p100, %p101
    %p103 = scmp.ne.s32.totalorder %s91, %s92
    %p104 = scmp.eq.s32.totalorder %s19, 1
    %p105 = por %p103, %p104
    %p107 = scmp.ne.s32.totalorder %s92, %s106
    %p108 = scmp.eq.s32.totalorder %s19, 0
    %p109 = por %p107, %p108
    %s111 = sadd.s32 %s110, 1
    %p114 = scmp.eq.s32.totalorder %s13, 1
    %p115 = scmp.ne.s32.totalorder %s110, %s112
    %p116 = scmp.eq.s32.totalorder %s13, 0
    %p117 = por %p115, %p116
    %p118 = scmp.ne.s32.totalorder %s110, %s112
    %p119 = scmp.eq.s32.totalorder %s18, 1
    %p120 = por %p118, %p119
    %p121 = scmp.ne.s32.totalorder %s112, %s113
    %p122 = scmp.eq.s32.totalorder %s18, 0
    %p123 = por %p121, %p122
    %p124 = scmp.ne.s32.totalorder %s112, %s113
    %p125 = scmp.eq.s32.totalorder %s19, 1
    %p126 = por %p124, %p125
    %p128 = scmp.ne.s32.totalorder %s113, %s127
    %p129 = scmp.eq.s32.totalorder %s19, 0
    %p130 = por %p128, %p129
    %s132 = sadd.s32 %s131, 1
    %p135 = scmp.eq.s32.totalorder %s13, 1
    %p136 = scmp.ne.s32.totalorder %s131, %s133
    %p137 = scmp.eq.s32.totalorder %s13, 0
    %p138 = por %p136, %p137
    %p139 = scmp.ne.s32.totalorder %s131, %s133
    %p140 = scmp.eq.s32.totalorder %s18, 1
    %p141 = por %p139, %p140
    %p142 = scmp.ne.s32.totalorder %s133, %s134
    %p143 = scmp.eq.s32.totalorder %s18, 0
    %p144 = por %p142, %p143
    %p145 = scmp.ne.s32.totalorder %s133, %s134
    %p146 = scmp.eq.s32.totalorder %s19, 1
    %p147 = por %p145, %p146
    %p149 = scmp.ne.s32.totalorder %s134, %s148
    %p150 = scmp.eq.s32.totalorder %s19, 0
    %p151 = por %p149, %p150
    %s153 = sadd.s32 %s152, 1
    %p156 = scmp.eq.s32.totalorder %s13, 1
    %p157 = scmp.ne.s32.totalorder %s152, %s154
    %p158 = scmp.eq.s32.totalorder %s13, 0
    %p159 = por %p157, %p158
    %p160 = scmp.ne.s32.totalorder %s152, %s154
    %p161 = scmp.eq.s32.totalorder %s18, 1
    %p162 = por %p160, %p161
    %p163 = scmp.ne.s32.totalorder %s154, %s155
    %p164 = scmp.eq.s32.totalorder %s18, 0
    %p165 = por %p163, %p164
    %p166 = scmp.ne.s32.totalorder %s154, %s155
    %p167 = scmp.eq.s32.totalorder %s19, 1
    %p168 = por %p166, %p167
    %p170 = scmp.ne.s32.totalorder %s155, %s169
    %p171 = scmp.eq.s32.totalorder %s19, 0
    %p172 = por %p170, %p171
    %s173 = ssub.s32 %s13, %s20
    %p174 = scmp.eq.s32.totalorder %s173, 0
    %s176 = sadd.s32 %s175, 1
    %s177 = scalar_select %p174, %s175, %s176
    %p180 = pneg %p174
    %p181 = scmp.eq.s32.totalorder %s13, 1
    %p182 = por %p180, %p181
    %p183 = scmp.ne.s32.totalorder %s175, %s178
    %p184 = scmp.eq.s32.totalorder %s13, 0
    %p185 = por %p183, %p184
    %p186 = scmp.ne.s32.totalorder %s175, %s178
    %p187 = scmp.eq.s32.totalorder %s18, 1
    %p188 = por %p186, %p187
    %p189 = scmp.ne.s32.totalorder %s178, %s179
    %p190 = scmp.eq.s32.totalorder %s18, 0
    %p191 = por %p189, %p190
    %p192 = scmp.ne.s32.totalorder %s178, %s179
    %p193 = scmp.eq.s32.totalorder %s19, 1
    %p194 = por %p192, %p193
    %p196 = scmp.ne.s32.totalorder %s179, %s195
    %p197 = scmp.eq.s32.totalorder %s19, 0
    %p198 = por %p196, %p197
    %p199 = scmp.le.s32.totalorder 1, %s13
    %p200 = scmp.lt.s32.totalorder %s13, 3
    %p201 = pnand %p199, %p200
    %p202 = pneg %p201
    // Predicated region
    $region9: #{downblock_forward.1} parent=5 // pred_check
      _
    $region10: #{downblock_forward.1} parent=5 // pred_check_branch
      %204 = sbr.rel (%p201) target = $region12
    $region11: #{downblock_forward.1} parent=5 // pred_region
      %s205 = ssub.s32 %s13, 1
      // Predicated region
      $region13: #{downblock_forward.1} parent=11 // pred_check
        %p206 = pneg %p60
      $region14: #{downblock_forward.1} parent=11 // pred_check_branch
        %208 = sbr.rel (%p206) target = $region16
      $region15: #{downblock_forward.1} parent=11 // pred_region
        _
      $region16: #{downblock_forward.1} parent=11 // pred_fallthru
        _
      // Predicated region
      $region17: #{downblock_forward.1} parent=11 // pred_check
        %p209 = pneg %p81
      $region18: #{downblock_forward.1} parent=11 // pred_check_branch
        %211 = sbr.rel (%p209) target = $region20
      $region19: #{downblock_forward.1} parent=11 // pred_region
        _
      $region20: #{downblock_forward.1} parent=11 // pred_fallthru
        _
      // Predicated region
      $region21: #{downblock_forward.1} parent=11 // pred_check
        %p212 = pneg %p102
      $region22: #{downblock_forward.1} parent=11 // pred_check_branch
        %214 = sbr.rel (%p212) target = $region24
      $region23: #{downblock_forward.1} parent=11 // pred_region
        _
      $region24: #{downblock_forward.1} parent=11 // pred_fallthru
        _
      // Predicated region
      $region25: #{downblock_forward.1} parent=11 // pred_check
        %p215 = pneg %p123
      $region26: #{downblock_forward.1} parent=11 // pred_check_branch
        %217 = sbr.rel (%p215) target = $region28
      $region27: #{downblock_forward.1} parent=11 // pred_region
        _
      $region28: #{downblock_forward.1} parent=11 // pred_fallthru
        _
      // Predicated region
      $region29: #{downblock_forward.1} parent=11 // pred_check
        %p218 = pneg %p144
      $region30: #{downblock_forward.1} parent=11 // pred_check_branch
        %220 = sbr.rel (%p218) target = $region32
      $region31: #{downblock_forward.1} parent=11 // pred_region
        _
      $region32: #{downblock_forward.1} parent=11 // pred_fallthru
        _
      // Predicated region
      $region33: #{downblock_forward.1} parent=11 // pred_check
        %p221 = pneg %p165
      $region34: #{downblock_forward.1} parent=11 // pred_check_branch
        %223 = sbr.rel (%p221) target = $region36
      $region35: #{downblock_forward.1} parent=11 // pred_region
        _
      $region36: #{downblock_forward.1} parent=11 // pred_fallthru
        _
    $region12: #{downblock_forward.1} parent=5 // pred_fallthru
      _
    %p224 = scmp.lt.s32.totalorder %s13, 2
    // Predicated region
    $region37: #{downblock_forward.1} parent=5 // pred_check
      %p225 = pneg %p224
    $region38: #{downblock_forward.1} parent=5 // pred_check_branch
      %227 = sbr.rel (%p225) target = $region40
    $region39: #{downblock_forward.1} parent=5 // pred_region
      // Predicated region
      $region41: #{downblock_forward.1} parent=39 // pred_check
        %p228 = pneg %p33
      $region42: #{downblock_forward.1} parent=39 // pred_check_branch
        %230 = sbr.rel (%p228) target = $region44
      $region43: #{downblock_forward.1} parent=39 // pred_region
        %p231 = scmp.lt.s32.totalorder %s13, 1
        %s232 = scalar_select %p231, %s13, 1
        %s233 = smul.addr %s232, 16
        %s234 = smul.addr %s233, 8
        %s235 = scalar_lea.vmem %s0, %s234
      $region44: #{downblock_forward.1} parent=39 // pred_fallthru
        _
    $region40: #{downblock_forward.1} parent=5 // pred_fallthru
      _
    %p236 = scmp.le.s32.totalorder 1, %s13
    %p237 = scmp.lt.s32.totalorder %s13, 3
    %p238 = pnand %p236, %p237
    %p239 = pneg %p238
    // Predicated region
    $region45: #{downblock_forward.1} parent=5 // pred_check
      _
    $region46: #{downblock_forward.1} parent=5 // pred_check_branch
      %241 = sbr.rel (%p238) target = $region48
    $region47: #{downblock_forward.1} parent=5 // pred_region
      %s242 = ssub.s32 %s13, 1
      %p243 = scmp.lt.s32.totalorder %s18, 1
      %s244 = scalar_select %p243, %s18, 1
      %s245 = smul.addr %s244, 16
      %s246 = smul.addr %s245, 8
      %s247 = scalar_lea.vmem %s0, %s246
      %p248 = pneg %p39
      %p249 = pneg %p36
      %p250 = pneg %p60
      %p251 = pneg %p57
      %p252 = pneg %p81
      %p253 = pneg %p78
      %p254 = pneg %p102
      %p255 = pneg %p99
      %p256 = pneg %p123
      %p257 = pneg %p120
      %p258 = pneg %p144
      %p259 = pneg %p141
      %p260 = pneg %p165
      %p261 = pneg %p162
      %p262 = pneg %p191
      %p263 = pneg %p188
      %p264 = scmp.lt.s32.totalorder %s18, 1
      %s265 = scalar_select %p264, %s18, 1
      %s266 = smul.addr %s265, 16
      %s267 = smul.addr %s266, 8
      %s268 = scalar_lea.vmem %s7, %s267
      %p269 = scmp.lt.s32.totalorder %s18, 1
      %s270 = scalar_select %p269, %s18, 1
      %s271 = smul.addr %s270, 16
      %s272 = smul.addr %s271, 8
      %s273 = scalar_lea.vmem %s0, %s272
      %p274 = scmp.lt.s32.totalorder %s18, 1
      %s275 = scalar_select %p274, %s18, 1
      %s276 = smul.addr %s275, 16
      %s277 = smul.addr %s276, 8
      %s278 = scalar_lea.vmem %s7, %s277
      %vm280 = vcmask 97280
      %281 = vst.msk [vmem:[#allocation2] sm:$0xff] %vm280, 0.0
      %282 = vst.msk [vmem:[#allocation2 + $0x8] sm:$0xff] %vm280, 0.0
      %vm283 = vcmask 90112
      %284 = vst.msk [vmem:[#allocation2 + $0x10] sm:$0x1] %vm283, 0.0
      %285 = vst.msk [vmem:[#allocation2 + $0x8f] sm:$0xff] %vm280, 0.0
      %286 = vst.msk [vmem:[#allocation2 + $0x97] sm:$0xff] %vm280, 0.0
      %287 = vst.msk [vmem:[#allocation2 + $0x9f] sm:$0x1] %vm283, 0.0
      %vm288 = vcmask 195584
      %289 = vst.msk [vmem:[#allocation3] sm:$0xff] %vm288, 0.0
      %290 = vst.msk [vmem:[#allocation3 + $0x8] sm:$0xff] %vm288, 0.0
      %vm291 = vcmask 188416
      %292 = vst.msk [vmem:[#allocation3 + $0x10] sm:$0x1] %vm291, 0.0
      %293 = vst.msk [vmem:[#allocation3 + $0x8f] sm:$0xff] %vm288, 0.0
      %294 = vst.msk [vmem:[#allocation3 + $0x97] sm:$0xff] %vm288, 0.0
      %295 = vst.msk [vmem:[#allocation3 + $0x9f] sm:$0x1] %vm291, 0.0
      %v296 = vld [vmem:[%s273] sm:$0xff]
      %v297 = vld [vmem:[%s273 + $0x8] sm:$0xff]
      %v298 = vld [vmem:[%s273 + $0x10] sm:$0xff]
      %v299 = vld [vmem:[%s273 + $0x18] sm:$0xff]
      %v300 = vld [vmem:[%s273 + $0x20] sm:$0xff]
      %v301 = vld [vmem:[%s273 + $0x28] sm:$0xff]
      %v302 = vld [vmem:[%s273 + $0x30] sm:$0xff]
      %v303 = vld [vmem:[%s273 + $0x38] sm:$0xff]
      %v304 = vld [vmem:[%s273 + $0x40] sm:$0xff]
      %v305 = vld [vmem:[%s273 + $0x48] sm:$0xff]
      %v306 = vld [vmem:[%s273 + $0x50] sm:$0xff]
      %v307 = vld [vmem:[%s273 + $0x58] sm:$0xff]
      %v308 = vld [vmem:[%s273 + $0x60] sm:$0xff]
      %v309 = vld [vmem:[%s273 + $0x68] sm:$0xff]
      %v310 = vld [vmem:[%s273 + $0x70] sm:$0xff]
      %v311 = vld [vmem:[%s273 + $0x78] sm:$0xff]
      %v312 = vmax.f32 %v296, %v297
      %v313 = vmax.f32 %v298, %v299
      %v314 = vmax.f32 %v300, %v301
      %v315 = vmax.f32 %v302, %v303
      %v316 = vmax.f32 %v304, %v305
      %v317 = vmax.f32 %v306, %v307
      %v318 = vmax.f32 %v308, %v309
      %v319 = vmax.f32 %v310, %v311
      %328 = vrot.lane.b32.xlu0 %v312, 124
      %v329 = vpop.permute.xlu0 %328
      %330 = vrot.lane.b32.xlu0 %v313, 124
      %v331 = vpop.permute.xlu0 %330
      %332 = vrot.lane.b32.xlu0 %v314, 124
      %v333 = vpop.permute.xlu0 %332
      %334 = vrot.lane.b32.xlu0 %v315, 124
      %v335 = vpop.permute.xlu0 %334
      %336 = vrot.lane.b32.xlu0 %v316, 124
      %v337 = vpop.permute.xlu0 %336
      %338 = vrot.lane.b32.xlu0 %v317, 124
      %v339 = vpop.permute.xlu0 %338
      %340 = vrot.lane.b32.xlu0 %v318, 124
      %v341 = vpop.permute.xlu0 %340
      %342 = vrot.lane.b32.xlu0 %v319, 124
      %v343 = vpop.permute.xlu0 %342
      %v352 = vmax.f32 %v312, %v329
      %v353 = vmax.f32 %v313, %v331
      %v354 = vmax.f32 %v314, %v333
      %v355 = vmax.f32 %v315, %v335
      %v356 = vmax.f32 %v316, %v337
      %v357 = vmax.f32 %v317, %v339
      %v358 = vmax.f32 %v318, %v341
      %v359 = vmax.f32 %v319, %v343
      %vm360 = vcmask 31744
      %361 = vst.msk [vmem:[#allocation2 + $0x11] sm:$0xff] %vm360, %v352
      %362 = vst.msk [vmem:[#allocation2 + $0x19] sm:$0xff] %vm360, 0.0
      %363 = vst.msk [vmem:[#allocation2 + $0x21] sm:$0xff] %vm360, %v353
      %364 = vst.msk [vmem:[#allocation2 + $0x29] sm:$0xff] %vm360, 0.0
      %365 = vst.msk [vmem:[#allocation2 + $0x31] sm:$0xff] %vm360, %v354
      %366 = vst.msk [vmem:[#allocation2 + $0x39] sm:$0xff] %vm360, 0.0
      %367 = vst.msk [vmem:[#allocation2 + $0x41] sm:$0xff] %vm360, %v355
      %368 = vst.msk [vmem:[#allocation2 + $0x49] sm:$0xff] %vm360, 0.0
      %369 = vst.msk [vmem:[#allocation2 + $0x51] sm:$0xff] %vm360, %v356
      %370 = vst.msk [vmem:[#allocation2 + $0x59] sm:$0xff] %vm360, 0.0
      %371 = vst.msk [vmem:[#allocation2 + $0x61] sm:$0xff] %vm360, %v357
      %372 = vst.msk [vmem:[#allocation2 + $0x69] sm:$0xff] %vm360, 0.0
      %373 = vst.msk [vmem:[#allocation2 + $0x71] sm:$0xff] %vm360, %v358
      %374 = vst.msk [vmem:[#allocation2 + $0x79] sm:$0xff] %vm360, 0.0
      %375 = vst.msk [vmem:[#allocation2 + $0x81] sm:$0xff] %vm360, %v359
      %376 = vst.msk [vmem:[#allocation2 + $0x89] sm:$0xff] %vm360, 0.0
      %386 = vrot.lane.b32.xlu0 %v352, 4
      %v387 = vpop.permute.xlu0 %386
      %388 = vrot.lane.b32.xlu0 0.0, 4
      %v389 = vpop.permute.xlu0 %388
      %390 = vrot.lane.b32.xlu0 %v353, 4
      %v391 = vpop.permute.xlu0 %390
      %392 = vrot.lane.b32.xlu0 %v354, 4
      %v393 = vpop.permute.xlu0 %392
      %394 = vrot.lane.b32.xlu0 %v355, 4
      %v395 = vpop.permute.xlu0 %394
      %396 = vrot.lane.b32.xlu0 %v356, 4
      %v397 = vpop.permute.xlu0 %396
      %398 = vrot.lane.b32.xlu0 %v357, 4
      %v399 = vpop.permute.xlu0 %398
      %400 = vrot.lane.b32.xlu0 %v358, 4
      %v401 = vpop.permute.xlu0 %400
      %402 = vrot.lane.b32.xlu0 %v359, 4
      %v403 = vpop.permute.xlu0 %402
      %vm413 = vcmask 64544
      %414 = vst.msk [vmem:[#allocation2 + $0x10] sm:$0xff] %vm413, %v387
      %415 = vst.msk [vmem:[#allocation2 + $0x18] sm:$0xff] %vm413, %v389
      %416 = vst.msk [vmem:[#allocation2 + $0x20] sm:$0xff] %vm413, %v391
      %417 = vst.msk [vmem:[#allocation2 + $0x28] sm:$0xff] %vm413, %v389
      %418 = vst.msk [vmem:[#allocation2 + $0x30] sm:$0xff] %vm413, %v393
      %419 = vst.msk [vmem:[#allocation2 + $0x38] sm:$0xff] %vm413, %v389
      %420 = vst.msk [vmem:[#allocation2 + $0x40] sm:$0xff] %vm413, %v395
      %421 = vst.msk [vmem:[#allocation2 + $0x48] sm:$0xff] %vm413, %v389
      %422 = vst.msk [vmem:[#allocation2 + $0x50] sm:$0xff] %vm413, %v397
      %423 = vst.msk [vmem:[#allocation2 + $0x58] sm:$0xff] %vm413, %v389
      %424 = vst.msk [vmem:[#allocation2 + $0x60] sm:$0xff] %vm413, %v399
      %425 = vst.msk [vmem:[#allocation2 + $0x68] sm:$0xff] %vm413, %v389
      %426 = vst.msk [vmem:[#allocation2 + $0x70] sm:$0xff] %vm413, %v401
      %427 = vst.msk [vmem:[#allocation2 + $0x78] sm:$0xff] %vm413, %v389
      %428 = vst.msk [vmem:[#allocation2 + $0x80] sm:$0xff] %vm413, %v403
      %429 = vst.msk [vmem:[#allocation2 + $0x88] sm:$0xff] %vm413, %v389
      %430 = vrot.lane.b32.xlu0 %v352, 8
      %v431 = vpop.permute.xlu0 %430
      %432 = vrot.lane.b32.xlu0 0.0, 8
      %v433 = vpop.permute.xlu0 %432
      %434 = vrot.lane.b32.xlu0 %v353, 8
      %v435 = vpop.permute.xlu0 %434
      %436 = vrot.lane.b32.xlu0 %v354, 8
      %v437 = vpop.permute.xlu0 %436
      %438 = vrot.lane.b32.xlu0 %v355, 8
      %v439 = vpop.permute.xlu0 %438
      %440 = vrot.lane.b32.xlu0 %v356, 8
      %v441 = vpop.permute.xlu0 %440
      %442 = vrot.lane.b32.xlu0 %v357, 8
      %v443 = vpop.permute.xlu0 %442
      %444 = vrot.lane.b32.xlu0 %v358, 8
      %v445 = vpop.permute.xlu0 %444
      %446 = vrot.lane.b32.xlu0 %v359, 8
      %v447 = vpop.permute.xlu0 %446
      %vm457 = vcmask 97344
      %458 = vst.msk [vmem:[#allocation2 + $0xf] sm:$0xff] %vm457, %v431
      %459 = vst.msk [vmem:[#allocation2 + $0x17] sm:$0xff] %vm457, %v433
      %460 = vst.msk [vmem:[#allocation2 + $0x1f] sm:$0xff] %vm457, %v435
      %461 = vst.msk [vmem:[#allocation2 + $0x27] sm:$0xff] %vm457, %v433
      %462 = vst.msk [vmem:[#allocation2 + $0x2f] sm:$0xff] %vm457, %v437
      %463 = vst.msk [vmem:[#allocation2 + $0x37] sm:$0xff] %vm457, %v433
      %464 = vst.msk [vmem:[#allocation2 + $0x3f] sm:$0xff] %vm457, %v439
      %465 = vst.msk [vmem:[#allocation2 + $0x47] sm:$0xff] %vm457, %v433
      %466 = vst.msk [vmem:[#allocation2 + $0x4f] sm:$0xff] %vm457, %v441
      %467 = vst.msk [vmem:[#allocation2 + $0x57] sm:$0xff] %vm457, %v433
      %468 = vst.msk [vmem:[#allocation2 + $0x5f] sm:$0xff] %vm457, %v443
      %469 = vst.msk [vmem:[#allocation2 + $0x67] sm:$0xff] %vm457, %v433
      %470 = vst.msk [vmem:[#allocation2 + $0x6f] sm:$0xff] %vm457, %v445
      %471 = vst.msk [vmem:[#allocation2 + $0x77] sm:$0xff] %vm457, %v433
      %472 = vst.msk [vmem:[#allocation2 + $0x7f] sm:$0xff] %vm457, %v447
      %473 = vst.msk [vmem:[#allocation2 + $0x87] sm:$0xff] %vm457, %v433
      %v474 = vld [vmem:[#allocation2] sm:$0xff]
      %v475 = vld [vmem:[#allocation2 + $0x8] sm:$0xff]
      %v476 = vld [vmem:[#allocation2 + $0x10] sm:$0xff]
      %v477 = vld [vmem:[#allocation2 + $0x18] sm:$0xff]
      %v478 = vld [vmem:[#allocation2 + $0x20] sm:$0xff]
      %v479 = vld [vmem:[#allocation2 + $0x28] sm:$0xff]
      %v480 = vld [vmem:[#allocation2 + $0x30] sm:$0xff]
      %v481 = vld [vmem:[#allocation2 + $0x38] sm:$0xff]
      %v482 = vld [vmem:[#allocation2 + $0x40] sm:$0xff]
      %v483 = vld [vmem:[#allocation2 + $0x48] sm:$0xff]
      %v484 = vld [vmem:[#allocation2 + $0x50] sm:$0xff]
      %v485 = vld [vmem:[#allocation2 + $0x58] sm:$0xff]
      %v486 = vld [vmem:[#allocation2 + $0x60] sm:$0xff]
      %v487 = vld [vmem:[#allocation2 + $0x68] sm:$0xff]
      %v488 = vld [vmem:[#allocation2 + $0x70] sm:$0xff]
      %v489 = vld [vmem:[#allocation2 + $0x78] sm:$0xff]
      %v490 = vpack.c.bf16 %v475, %v474
      %v491 = vpack.c.bf16 %v477, %v476
      %v492 = vpack.c.bf16 %v479, %v478
      %v493 = vpack.c.bf16 %v481, %v480
      %v494 = vpack.c.bf16 %v483, %v482
      %v495 = vpack.c.bf16 %v485, %v484
      %v496 = vpack.c.bf16 %v487, %v486
      %v497 = vpack.c.bf16 %v489, %v488
      %v498 = vld [vmem:[%s1] sm:$0xf]
      %v499 = vld [vmem:[%s1 + $0x4] sm:$0x3]
      %v500 = vld [vmem:[#allocation2 + $0x80] sm:$0xff]
      %v501 = vld [vmem:[#allocation2 + $0x88] sm:$0xff]
      %v502 = vpack.c.bf16 %v501, %v500
      %s503 = scalar_lea.vmem %s1, 8
      %v504 = vld [vmem:[%s503] sm:$0xf]
      %v505 = vld [vmem:[%s503 + $0x4] sm:$0x3]
      %v508 = vunpack.c.l.b16 %v504
      %v509 = vunpack.c.l.b16 %v505
      %v510 = vpack.c.b16 %v509, %v508
      %v512 = vsel %vm280, %v491, 0
      %v515 = vsel %vm280, %v492, 0
      %v518 = vsel %vm280, %v493, 0
      %v521 = vsel %vm280, %v494, 0
      %v524 = vsel %vm280, %v495, 0
      %v527 = vsel %vm280, %v496, 0
      %v530 = vsel %vm280, %v497, 0
      %v533 = vsel %vm280, %v502, 0
      %vm535 = vcmask 1045504
      %v537 = vsel %vm535, %v510, 0
      %539 = vmatprep.subr.bf16.mxu0 0
      %540 = vmatpush1.bf16.msra.mxu0 0
      %541 = vmatprep.subr.bf16.mxu0 0
      %542 = vmatpush1.bf16.msra.mxu0 0
      %543 = vmatprep.subr.bf16.mxu0 0
      %544 = vmatpush1.bf16.msra.mxu0 0
      %545 = vmatprep.subr.bf16.mxu0 0
      %546 = vmatpush1.bf16.msra.mxu0 0
      %547 = vmatprep.subr.bf16.mxu0 0
      %548 = vmatpush1.bf16.msra.mxu0 0
      %549 = vmatprep.subr.bf16.mxu0 0
      %550 = vmatpush1.bf16.msra.mxu0 0
      %551 = vmatprep.subr.bf16.mxu0 0
      %552 = vmatpush1.bf16.msra.mxu0 0
      %553 = vmatprep.subr.bf16.mxu0 0
      %554 = vmatpush1.bf16.msra.mxu0 %v537
      %555 = vmatprep.subr.bf16.mxu0 0
      %556 = vmatpush2.bf16.msra.mxu0 0
      %557 = vmatprep.subr.bf16.mxu0 0
      %558 = vmatpush2.bf16.msra.mxu0 0
      %559 = vmatprep.subr.bf16.mxu0 0
      %560 = vmatpush2.bf16.msra.mxu0 0
      %561 = vmatprep.subr.bf16.mxu0 0
      %562 = vmatpush2.bf16.msra.mxu0 0
      %563 = vmatprep.subr.bf16.mxu0 0
      %564 = vmatpush2.bf16.msra.mxu0 0
      %565 = vmatprep.subr.bf16.mxu0 0
      %566 = vmatpush2.bf16.msra.mxu0 0
      %567 = vmatprep.subr.bf16.mxu0 0
      %568 = vmatpush2.bf16.msra.mxu0 0
      %569 = vmatprep.subr.bf16.mxu0 0
      %570 = vmatpush2.bf16.msra.mxu0 0
      %571 = vmatprep.mubr.bf16.mxu0 0
      %572 = vmatmul.mubr.bf16.gmra.mxu0 %v512
      %v573 = vpop.f32.mrf.mxu0
      %v574 = vadd.f32 0.0, %v573
      %v575 = vpop.f32.mrf.mxu0
      %v576 = vpop.f32.mrf.mxu0
      %v577 = vadd.f32 0.0, %v576
      %v578 = vpop.f32.mrf.mxu0
      %579 = vmatprep.mubr.bf16.mxu0 0
      %580 = vmatmul.mubr.bf16.gmra.mxu0 %v515
      %v581 = vpop.f32.mrf.mxu0
      %v582 = vadd.f32 0.0, %v581
      %v583 = vpop.f32.mrf.mxu0
      %v584 = vpop.f32.mrf.mxu0
      %v585 = vadd.f32 0.0, %v584
      %v586 = vpop.f32.mrf.mxu0
      %587 = vmatprep.mubr.bf16.mxu0 0
      %588 = vmatmul.mubr.bf16.gmra.mxu0 %v518
      %v589 = vpop.f32.mrf.mxu0
      %v590 = vadd.f32 0.0, %v589
      %v591 = vpop.f32.mrf.mxu0
      %v592 = vpop.f32.mrf.mxu0
      %v593 = vadd.f32 0.0, %v592
      %v594 = vpop.f32.mrf.mxu0
      %595 = vmatprep.mubr.bf16.mxu0 0
      %596 = vmatmul.mubr.bf16.gmra.mxu0 %v521
      %v597 = vpop.f32.mrf.mxu0
      %v598 = vadd.f32 0.0, %v597
      %v599 = vpop.f32.mrf.mxu0
      %v600 = vpop.f32.mrf.mxu0
      %v601 = vadd.f32 0.0, %v600
      %v602 = vpop.f32.mrf.mxu0
      %603 = vmatprep.mubr.bf16.mxu0 0
      %604 = vmatmul.mubr.bf16.gmra.mxu0 %v524
      %v605 = vpop.f32.mrf.mxu0
      %v606 = vadd.f32 0.0, %v605
      %v607 = vpop.f32.mrf.mxu0
      %v608 = vpop.f32.mrf.mxu0
      %v609 = vadd.f32 0.0, %v608
      %v610 = vpop.f32.mrf.mxu0
      %611 = vmatprep.mubr.bf16.mxu0 0
      %612 = vmatmul.mubr.bf16.gmra.mxu0 %v527
      %v613 = vpop.f32.mrf.mxu0
      %v614 = vadd.f32 0.0, %v613
      %v615 = vpop.f32.mrf.mxu0
      %v616 = vpop.f32.mrf.mxu0
      %v617 = vadd.f32 0.0, %v616
      %v618 = vpop.f32.mrf.mxu0
      %619 = vmatprep.mubr.bf16.mxu0 0
      %620 = vmatmul.mubr.bf16.gmra.mxu0 %v530
      %v621 = vpop.f32.mrf.mxu0
      %v622 = vadd.f32 0.0, %v621
      %v623 = vpop.f32.mrf.mxu0
      %v624 = vpop.f32.mrf.mxu0
      %v625 = vadd.f32 0.0, %v624
      %v626 = vpop.f32.mrf.mxu0
      %627 = vmatprep.mubr.bf16.mxu0 0
      %628 = vmatmul.mubr.bf16.gmra.mxu0 %v533
      %v629 = vpop.f32.mrf.mxu0
      %v630 = vadd.f32 0.0, %v629
      %v631 = vpop.f32.mrf.mxu0
      %v632 = vpop.f32.mrf.mxu0
      %v633 = vadd.f32 0.0, %v632
      %v634 = vpop.f32.mrf.mxu0
      %635 = vdwg.mxu0
      %v638 = vunpack.c.l.b16 %v498
      %v639 = vunpack.c.l.b16 %v499
      %v640 = vpack.c.b16 %v639, %v638
      %v642 = vsel %vm280, %v490, 0
      %v645 = vsel %vm535, %v640, 0
      %647 = vmatprep.subr.bf16.mxu0 0
      %648 = vmatpush1.bf16.msra.mxu0 0
      %649 = vmatprep.subr.bf16.mxu0 0
      %650 = vmatpush1.bf16.msra.mxu0 0
      %651 = vmatprep.subr.bf16.mxu0 0
      %652 = vmatpush1.bf16.msra.mxu0 0
      %653 = vmatprep.subr.bf16.mxu0 0
      %654 = vmatpush1.bf16.msra.mxu0 0
      %655 = vmatprep.subr.bf16.mxu0 0
      %656 = vmatpush1.bf16.msra.mxu0 0
      %657 = vmatprep.subr.bf16.mxu0 0
      %658 = vmatpush1.bf16.msra.mxu0 0
      %659 = vmatprep.subr.bf16.mxu0 0
      %660 = vmatpush1.bf16.msra.mxu0 0
      %661 = vmatprep.subr.bf16.mxu0 0
      %662 = vmatpush1.bf16.msra.mxu0 %v645
      %663 = vmatprep.subr.bf16.mxu0 0
      %664 = vmatpush2.bf16.msra.mxu0 0
      %665 = vmatprep.subr.bf16.mxu0 0
      %666 = vmatpush2.bf16.msra.mxu0 0
      %667 = vmatprep.subr.bf16.mxu0 0
      %668 = vmatpush2.bf16.msra.mxu0 0
      %669 = vmatprep.subr.bf16.mxu0 0
      %670 = vmatpush2.bf16.msra.mxu0 0
      %671 = vmatprep.subr.bf16.mxu0 0
      %672 = vmatpush2.bf16.msra.mxu0 0
      %673 = vmatprep.subr.bf16.mxu0 0
      %674 = vmatpush2.bf16.msra.mxu0 0
      %675 = vmatprep.subr.bf16.mxu0 0
      %676 = vmatpush2.bf16.msra.mxu0 0
      %677 = vmatprep.subr.bf16.mxu0 0
      %678 = vmatpush2.bf16.msra.mxu0 0
      %679 = vmatprep.mubr.bf16.mxu0 0
      %680 = vmatmul.mubr.bf16.gmra.mxu0 %v642
      %v681 = vpop.f32.mrf.mxu0
      %v682 = vadd.f32 %v574, %v681
      %v683 = vpop.f32.mrf.mxu0
      %v684 = vpop.f32.mrf.mxu0
      %v685 = vadd.f32 %v577, %v684
      %v686 = vpop.f32.mrf.mxu0
      %687 = vmatprep.mubr.bf16.mxu0 0
      %688 = vmatmul.mubr.bf16.gmra.mxu0 %v512
      %v689 = vpop.f32.mrf.mxu0
      %v690 = vadd.f32 %v582, %v689
      %v691 = vpop.f32.mrf.mxu0
      %v692 = vpop.f32.mrf.mxu0
      %v693 = vadd.f32 %v585, %v692
      %v694 = vpop.f32.mrf.mxu0
      %695 = vmatprep.mubr.bf16.mxu0 0
      %696 = vmatmul.mubr.bf16.gmra.mxu0 %v515
      %v697 = vpop.f32.mrf.mxu0
      %v698 = vadd.f32 %v590, %v697
      %v699 = vpop.f32.mrf.mxu0
      %v700 = vpop.f32.mrf.mxu0
      %v701 = vadd.f32 %v593, %v700
      %v702 = vpop.f32.mrf.mxu0
      %703 = vmatprep.mubr.bf16.mxu0 0
      %704 = vmatmul.mubr.bf16.gmra.mxu0 %v518
      %v705 = vpop.f32.mrf.mxu0
      %v706 = vadd.f32 %v598, %v705
      %v707 = vpop.f32.mrf.mxu0
      %v708 = vpop.f32.mrf.mxu0
      %v709 = vadd.f32 %v601, %v708
      %v710 = vpop.f32.mrf.mxu0
      %711 = vmatprep.mubr.bf16.mxu0 0
      %712 = vmatmul.mubr.bf16.gmra.mxu0 %v521
      %v713 = vpop.f32.mrf.mxu0
      %v714 = vadd.f32 %v606, %v713
      %v715 = vpop.f32.mrf.mxu0
      %v716 = vpop.f32.mrf.mxu0
      %v717 = vadd.f32 %v609, %v716
      %v718 = vpop.f32.mrf.mxu0
      %719 = vmatprep.mubr.bf16.mxu0 0
      %720 = vmatmul.mubr.bf16.gmra.mxu0 %v524
      %v721 = vpop.f32.mrf.mxu0
      %v722 = vadd.f32 %v614, %v721
      %v723 = vpop.f32.mrf.mxu0
      %v724 = vpop.f32.mrf.mxu0
      %v725 = vadd.f32 %v617, %v724
      %v726 = vpop.f32.mrf.mxu0
      %727 = vmatprep.mubr.bf16.mxu0 0
      %728 = vmatmul.mubr.bf16.gmra.mxu0 %v527
      %v729 = vpop.f32.mrf.mxu0
      %v730 = vadd.f32 %v622, %v729
      %v731 = vpop.f32.mrf.mxu0
      %v732 = vpop.f32.mrf.mxu0
      %v733 = vadd.f32 %v625, %v732
      %v734 = vpop.f32.mrf.mxu0
      %735 = vmatprep.mubr.bf16.mxu0 0
      %736 = vmatmul.mubr.bf16.gmra.mxu0 %v530
      %v737 = vpop.f32.mrf.mxu0
      %v738 = vadd.f32 %v630, %v737
      %v739 = vpop.f32.mrf.mxu0
      %v740 = vpop.f32.mrf.mxu0
      %v741 = vadd.f32 %v633, %v740
      %v742 = vpop.f32.mrf.mxu0
      %743 = vdwg.mxu0
      %v744 = vld [vmem:[#allocation2 + $0x20] sm:$0xff]
      %v745 = vld [vmem:[#allocation2 + $0x28] sm:$0xff]
      %v746 = vld [vmem:[#allocation2 + $0x30] sm:$0xff]
      %v747 = vld [vmem:[#allocation2 + $0x38] sm:$0xff]
      %v748 = vld [vmem:[#allocation2 + $0x40] sm:$0xff]
      %v749 = vld [vmem:[#allocation2 + $0x48] sm:$0xff]
      %v750 = vld [vmem:[#allocation2 + $0x50] sm:$0xff]
      %v751 = vld [vmem:[#allocation2 + $0x58] sm:$0xff]
      %v752 = vld [vmem:[#allocation2 + $0x60] sm:$0xff]
      %v753 = vld [vmem:[#allocation2 + $0x68] sm:$0xff]
      %v754 = vld [vmem:[#allocation2 + $0x70] sm:$0xff]
      %v755 = vld [vmem:[#allocation2 + $0x78] sm:$0xff]
      %v756 = vld [vmem:[#allocation2 + $0x80] sm:$0xff]
      %v757 = vld [vmem:[#allocation2 + $0x88] sm:$0xff]
      %v758 = vld [vmem:[#allocation2 + $0x90] sm:$0xff]
      %v759 = vld [vmem:[#allocation2 + $0x98] sm:$0xff]
      %v760 = vpack.c.bf16 %v745, %v744
      %v761 = vpack.c.bf16 %v747, %v746
      %v762 = vpack.c.bf16 %v749, %v748
      %v763 = vpack.c.bf16 %v751, %v750
      %v764 = vpack.c.bf16 %v753, %v752
      %v765 = vpack.c.bf16 %v755, %v754
      %v766 = vpack.c.bf16 %v757, %v756
      %v767 = vpack.c.bf16 %v759, %v758
      %s768 = scalar_lea.vmem %s1, 16
      %v769 = vld [vmem:[%s768] sm:$0xf]
      %v770 = vld [vmem:[%s768 + $0x4] sm:$0x3]
      %v773 = vunpack.c.l.b16 %v769
      %v774 = vunpack.c.l.b16 %v770
      %v775 = vpack.c.b16 %v774, %v773
      %v777 = vsel %vm280, %v760, 0
      %v780 = vsel %vm280, %v761, 0
      %v783 = vsel %vm280, %v762, 0
      %v786 = vsel %vm280, %v763, 0
      %v789 = vsel %vm280, %v764, 0
      %v792 = vsel %vm280, %v765, 0
      %v795 = vsel %vm280, %v766, 0
      %v798 = vsel %vm280, %v767, 0
      %v801 = vsel %vm535, %v775, 0
      %803 = vmatprep.subr.bf16.mxu0 0
      %804 = vmatpush1.bf16.msra.mxu0 0
      %805 = vmatprep.subr.bf16.mxu0 0
      %806 = vmatpush1.bf16.msra.mxu0 0
      %807 = vmatprep.subr.bf16.mxu0 0
      %808 = vmatpush1.bf16.msra.mxu0 0
      %809 = vmatprep.subr.bf16.mxu0 0
      %810 = vmatpush1.bf16.msra.mxu0 0
      %811 = vmatprep.subr.bf16.mxu0 0
      %812 = vmatpush1.bf16.msra.mxu0 0
      %813 = vmatprep.subr.bf16.mxu0 0
      %814 = vmatpush1.bf16.msra.mxu0 0
      %815 = vmatprep.subr.bf16.mxu0 0
      %816 = vmatpush1.bf16.msra.mxu0 0
      %817 = vmatprep.subr.bf16.mxu0 0
      %818 = vmatpush1.bf16.msra.mxu0 %v801
      %819 = vmatprep.subr.bf16.mxu0 0
      %820 = vmatpush2.bf16.msra.mxu0 0
      %821 = vmatprep.subr.bf16.mxu0 0
      %822 = vmatpush2.bf16.msra.mxu0 0
      %823 = vmatprep.subr.bf16.mxu0 0
      %824 = vmatpush2.bf16.msra.mxu0 0
      %825 = vmatprep.subr.bf16.mxu0 0
      %826 = vmatpush2.bf16.msra.mxu0 0
      %827 = vmatprep.subr.bf16.mxu0 0
      %828 = vmatpush2.bf16.msra.mxu0 0
      %829 = vmatprep.subr.bf16.mxu0 0
      %830 = vmatpush2.bf16.msra.mxu0 0
      %831 = vmatprep.subr.bf16.mxu0 0
      %832 = vmatpush2.bf16.msra.mxu0 0
      %833 = vmatprep.subr.bf16.mxu0 0
      %834 = vmatpush2.bf16.msra.mxu0 0
      %835 = vmatprep.mubr.bf16.mxu0 0
      %836 = vmatmul.mubr.bf16.gmra.mxu0 %v777
      %v837 = vpop.f32.mrf.mxu0
      %v838 = vadd.f32 0.0, %v837
      %v839 = vpop.f32.mrf.mxu0
      %v840 = vpop.f32.mrf.mxu0
      %v841 = vadd.f32 0.0, %v840
      %v842 = vpop.f32.mrf.mxu0
      %843 = vmatprep.mubr.bf16.mxu0 0
      %844 = vmatmul.mubr.bf16.gmra.mxu0 %v780
      %v845 = vpop.f32.mrf.mxu0
      %v846 = vadd.f32 0.0, %v845
      %v847 = vpop.f32.mrf.mxu0
      %v848 = vpop.f32.mrf.mxu0
      %v849 = vadd.f32 0.0, %v848
      %v850 = vpop.f32.mrf.mxu0
      %851 = vmatprep.mubr.bf16.mxu0 0
      %852 = vmatmul.mubr.bf16.gmra.mxu0 %v783
      %v853 = vpop.f32.mrf.mxu0
      %v854 = vadd.f32 0.0, %v853
      %v855 = vpop.f32.mrf.mxu0
      %v856 = vpop.f32.mrf.mxu0
      %v857 = vadd.f32 0.0, %v856
      %v858 = vpop.f32.mrf.mxu0
      %859 = vmatprep.mubr.bf16.mxu0 0
      %860 = vmatmul.mubr.bf16.gmra.mxu0 %v786
      %v861 = vpop.f32.mrf.mxu0
      %v862 = vadd.f32 0.0, %v861
      %v863 = vpop.f32.mrf.mxu0
      %v864 = vpop.f32.mrf.mxu0
      %v865 = vadd.f32 0.0, %v864
      %v866 = vpop.f32.mrf.mxu0
      %867 = vmatprep.mubr.bf16.mxu0 0
      %868 = vmatmul.mubr.bf16.gmra.mxu0 %v789
      %v869 = vpop.f32.mrf.mxu0
      %v870 = vadd.f32 0.0, %v869
      %v871 = vpop.f32.mrf.mxu0
      %v872 = vpop.f32.mrf.mxu0
      %v873 = vadd.f32 0.0, %v872
      %v874 = vpop.f32.mrf.mxu0
      %875 = vmatprep.mubr.bf16.mxu0 0
      %876 = vmatmul.mubr.bf16.gmra.mxu0 %v792
      %v877 = vpop.f32.mrf.mxu0
      %v878 = vadd.f32 0.0, %v877
      %v879 = vpop.f32.mrf.mxu0
      %v880 = vpop.f32.mrf.mxu0
      %v881 = vadd.f32 0.0, %v880
      %v882 = vpop.f32.mrf.mxu0
      %883 = vmatprep.mubr.bf16.mxu0 0
      %884 = vmatmul.mubr.bf16.gmra.mxu0 %v795
      %v885 = vpop.f32.mrf.mxu0
      %v886 = vadd.f32 0.0, %v885
      %v887 = vpop.f32.mrf.mxu0
      %v888 = vpop.f32.mrf.mxu0
      %v889 = vadd.f32 0.0, %v888
      %v890 = vpop.f32.mrf.mxu0
      %891 = vmatprep.mubr.bf16.mxu0 0
      %892 = vmatmul.mubr.bf16.gmra.mxu0 %v798
      %v893 = vpop.f32.mrf.mxu0
      %v894 = vadd.f32 0.0, %v893
      %v895 = vpop.f32.mrf.mxu0
      %v896 = vpop.f32.mrf.mxu0
      %v897 = vadd.f32 0.0, %v896
      %v898 = vpop.f32.mrf.mxu0
      %899 = vdwg.mxu0
      %v900 = vadd.f32 %v682, %v838
      %v901 = vadd.f32 %v685, %v841
      %v902 = vadd.f32 %v690, %v846
      %v903 = vadd.f32 %v693, %v849
      %v904 = vadd.f32 %v698, %v854
      %v905 = vadd.f32 %v701, %v857
      %v906 = vadd.f32 %v706, %v862
      %v907 = vadd.f32 %v709, %v865
      %v908 = vadd.f32 %v714, %v870
      %v909 = vadd.f32 %v717, %v873
      %v910 = vadd.f32 %v722, %v878
      %v911 = vadd.f32 %v725, %v881
      %v912 = vadd.f32 %v730, %v886
      %v913 = vadd.f32 %v733, %v889
      %v914 = vadd.f32 %v738, %v894
      %v915 = vadd.f32 %v741, %v897
      %v916 = vld [vmem:[%s2] sm:$0x1]
      %v918 = vlaneseq
      %v919 = vshrl.u32 %v918, 7
      %v920 = vsub.s32 0, %v919
      %v921 = vrot.slane %v916, %v920
      %v923 = vmul.f32 %v900, %v921
      %v924 = vmul.f32 %v901, %v921
      %v925 = vmul.f32 %v902, %v921
      %v926 = vmul.f32 %v903, %v921
      %v927 = vmul.f32 %v904, %v921
      %v928 = vmul.f32 %v905, %v921
      %v929 = vmul.f32 %v906, %v921
      %v930 = vmul.f32 %v907, %v921
      %v931 = vmul.f32 %v908, %v921
      %v932 = vmul.f32 %v909, %v921
      %v933 = vmul.f32 %v910, %v921
      %v934 = vmul.f32 %v911, %v921
      %v935 = vmul.f32 %v912, %v921
      %v936 = vmul.f32 %v913, %v921
      %v937 = vmul.f32 %v914, %v921
      %v938 = vmul.f32 %v915, %v921
      %v939 = vld [vmem:[%s3] sm:$0x1]
      %v941 = vlaneseq
      %v942 = vshrl.u32 %v941, 7
      %v943 = vsub.s32 0, %v942
      %v944 = vrot.slane %v939, %v943
      %v946 = vadd.f32 %v923, %v944
      %v947 = vadd.f32 %v924, %v944
      %v948 = vadd.f32 %v925, %v944
      %v949 = vadd.f32 %v926, %v944
      %v950 = vadd.f32 %v927, %v944
      %v951 = vadd.f32 %v928, %v944
      %v952 = vadd.f32 %v929, %v944
      %v953 = vadd.f32 %v930, %v944
      %v954 = vadd.f32 %v931, %v944
      %v955 = vadd.f32 %v932, %v944
      %v956 = vadd.f32 %v933, %v944
      %v957 = vadd.f32 %v934, %v944
      %v958 = vadd.f32 %v935, %v944
      %v959 = vadd.f32 %v936, %v944
      %v960 = vadd.f32 %v937, %v944
      %v961 = vadd.f32 %v938, %v944
      %vm962 = vcmp.ge.f32.partialorder %v946, 0.0
      %vm963 = vcmp.ge.f32.partialorder %v947, 0.0
      %vm964 = vcmp.ge.f32.partialorder %v948, 0.0
      %vm965 = vcmp.ge.f32.partialorder %v949, 0.0
      %vm966 = vcmp.ge.f32.partialorder %v950, 0.0
      %vm967 = vcmp.ge.f32.partialorder %v951, 0.0
      %vm968 = vcmp.ge.f32.partialorder %v952, 0.0
      %vm969 = vcmp.ge.f32.partialorder %v953, 0.0
      %vm970 = vcmp.ge.f32.partialorder %v954, 0.0
      %vm971 = vcmp.ge.f32.partialorder %v955, 0.0
      %vm972 = vcmp.ge.f32.partialorder %v956, 0.0
      %vm973 = vcmp.ge.f32.partialorder %v957, 0.0
      %vm974 = vcmp.ge.f32.partialorder %v958, 0.0
      %vm975 = vcmp.ge.f32.partialorder %v959, 0.0
      %vm976 = vcmp.ge.f32.partialorder %v960, 0.0
      %vm977 = vcmp.ge.f32.partialorder %v961, 0.0
      %v978 = vmul.f32 %v946, 0.01
      %v979 = vmul.f32 %v947, 0.01
      %v980 = vmul.f32 %v948, 0.01
      %v981 = vmul.f32 %v949, 0.01
      %v982 = vmul.f32 %v950, 0.01
      %v983 = vmul.f32 %v951, 0.01
      %v984 = vmul.f32 %v952, 0.01
      %v985 = vmul.f32 %v953, 0.01
      %v986 = vmul.f32 %v954, 0.01
      %v987 = vmul.f32 %v955, 0.01
      %v988 = vmul.f32 %v956, 0.01
      %v989 = vmul.f32 %v957, 0.01
      %v990 = vmul.f32 %v958, 0.01
      %v991 = vmul.f32 %v959, 0.01
      %v992 = vmul.f32 %v960, 0.01
      %v993 = vmul.f32 %v961, 0.01
      %v994 = vsel %vm962, %v946, %v978
      %v995 = vsel %vm963, %v947, %v979
      %v996 = vsel %vm964, %v948, %v980
      %v997 = vsel %vm965, %v949, %v981
      %v998 = vsel %vm966, %v950, %v982
      %v999 = vsel %vm967, %v951, %v983
      %v1000 = vsel %vm968, %v952, %v984
      %v1001 = vsel %vm969, %v953, %v985
      %v1002 = vsel %vm970, %v954, %v986
      %v1003 = vsel %vm971, %v955, %v987
      %v1004 = vsel %vm972, %v956, %v988
      %v1005 = vsel %vm973, %v957, %v989
      %v1006 = vsel %vm974, %v958, %v990
      %v1007 = vsel %vm975, %v959, %v991
      %v1008 = vsel %vm976, %v960, %v992
      %v1009 = vsel %vm977, %v961, %v993
      %v1010 = vlaneseq
      %v1011 = vshrl.u32 %v1010, 7
      %v1012 = vadd.s32 %v1011, 8
      %v1013 = vadd.s32 %v1011, 16
      %v1014 = vadd.s32 %v1011, 24
      %v1015 = vadd.s32 %v1011, 32
      %v1016 = vadd.s32 %v1011, 40
      %v1017 = vadd.s32 %v1011, 48
      %v1018 = vadd.s32 %v1011, 56
      %v1019 = vadd.s32 %v1011, 64
      %v1020 = vadd.s32 %v1011, 72
      %v1021 = vadd.s32 %v1011, 80
      %v1022 = vadd.s32 %v1011, 88
      %v1023 = vadd.s32 %v1011, 96
      %v1024 = vadd.s32 %v1011, 104
      %v1025 = vadd.s32 %v1011, 112
      %v1026 = vadd.s32 %v1011, 120
      %vm1027 = vcmp.lt.s32.totalorder %v1011, 0
      %v1028 = vsub.s32 0, %v1011
      %v1029 = vsel %vm1027, %v1028, %v1011
      %v1030 = vshrl.u32 %v1029, 4
      %v1031 = vand.u32 %v1029, 15
      %v1032 = vsub.s32 0, %v1031
      %v1033 = vsel %vm1027, %v1032, %v1031
      %vm1034 = vcmp.lt.s32.totalorder %v1012, 0
      %v1035 = vsub.s32 0, %v1012
      %v1036 = vsel %vm1034, %v1035, %v1012
      %v1037 = vshrl.u32 %v1036, 4
      %v1038 = vand.u32 %v1036, 15
      %v1039 = vsub.s32 0, %v1038
      %v1040 = vsel %vm1034, %v1039, %v1038
      %vm1041 = vcmp.lt.s32.totalorder %v1013, 0
      %v1042 = vsub.s32 0, %v1013
      %v1043 = vsel %vm1041, %v1042, %v1013
      %v1044 = vshrl.u32 %v1043, 4
      %v1045 = vand.u32 %v1043, 15
      %v1046 = vsub.s32 0, %v1045
      %v1047 = vsel %vm1041, %v1046, %v1045
      %vm1048 = vcmp.lt.s32.totalorder %v1014, 0
      %v1049 = vsub.s32 0, %v1014
      %v1050 = vsel %vm1048, %v1049, %v1014
      %v1051 = vshrl.u32 %v1050, 4
      %v1052 = vand.u32 %v1050, 15
      %v1053 = vsub.s32 0, %v1052
      %v1054 = vsel %vm1048, %v1053, %v1052
      %vm1055 = vcmp.lt.s32.totalorder %v1015, 0
      %v1056 = vsub.s32 0, %v1015
      %v1057 = vsel %vm1055, %v1056, %v1015
      %v1058 = vshrl.u32 %v1057, 4
      %v1059 = vand.u32 %v1057, 15
      %v1060 = vsub.s32 0, %v1059
      %v1061 = vsel %vm1055, %v1060, %v1059
      %vm1062 = vcmp.lt.s32.totalorder %v1016, 0
      %v1063 = vsub.s32 0, %v1016
      %v1064 = vsel %vm1062, %v1063, %v1016
      %v1065 = vshrl.u32 %v1064, 4
      %v1066 = vand.u32 %v1064, 15
      %v1067 = vsub.s32 0, %v1066
      %v1068 = vsel %vm1062, %v1067, %v1066
      %vm1069 = vcmp.lt.s32.totalorder %v1017, 0
      %v1070 = vsub.s32 0, %v1017
      %v1071 = vsel %vm1069, %v1070, %v1017
      %v1072 = vshrl.u32 %v1071, 4
      %v1073 = vand.u32 %v1071, 15
      %v1074 = vsub.s32 0, %v1073
      %v1075 = vsel %vm1069, %v1074, %v1073
      %vm1076 = vcmp.lt.s32.totalorder %v1018, 0
      %v1077 = vsub.s32 0, %v1018
      %v1078 = vsel %vm1076, %v1077, %v1018
      %v1079 = vshrl.u32 %v1078, 4
      %v1080 = vand.u32 %v1078, 15
      %v1081 = vsub.s32 0, %v1080
      %v1082 = vsel %vm1076, %v1081, %v1080
      %vm1083 = vcmp.lt.s32.totalorder %v1019, 0
      %v1084 = vsub.s32 0, %v1019
      %v1085 = vsel %vm1083, %v1084, %v1019
      %v1086 = vshrl.u32 %v1085, 4
      %v1087 = vand.u32 %v1085, 15
      %v1088 = vsub.s32 0, %v1087
      %v1089 = vsel %vm1083, %v1088, %v1087
      %vm1090 = vcmp.lt.s32.totalorder %v1020, 0
      %v1091 = vsub.s32 0, %v1020
      %v1092 = vsel %vm1090, %v1091, %v1020
      %v1093 = vshrl.u32 %v1092, 4
      %v1094 = vand.u32 %v1092, 15
      %v1095 = vsub.s32 0, %v1094
      %v1096 = vsel %vm1090, %v1095, %v1094
      %vm1097 = vcmp.lt.s32.totalorder %v1021, 0
      %v1098 = vsub.s32 0, %v1021
      %v1099 = vsel %vm1097, %v1098, %v1021
      %v1100 = vshrl.u32 %v1099, 4
      %v1101 = vand.u32 %v1099, 15
      %v1102 = vsub.s32 0, %v1101
      %v1103 = vsel %vm1097, %v1102, %v1101
      %vm1104 = vcmp.lt.s32.totalorder %v1022, 0
      %v1105 = vsub.s32 0, %v1022
      %v1106 = vsel %vm1104, %v1105, %v1022
      %v1107 = vshrl.u32 %v1106, 4
      %v1108 = vand.u32 %v1106, 15
      %v1109 = vsub.s32 0, %v1108
      %v1110 = vsel %vm1104, %v1109, %v1108
      %vm1111 = vcmp.lt.s32.totalorder %v1023, 0
      %v1112 = vsub.s32 0, %v1023
      %v1113 = vsel %vm1111, %v1112, %v1023
      %v1114 = vshrl.u32 %v1113, 4
      %v1115 = vand.u32 %v1113, 15
      %v1116 = vsub.s32 0, %v1115
      %v1117 = vsel %vm1111, %v1116, %v1115
      %vm1118 = vcmp.lt.s32.totalorder %v1024, 0
      %v1119 = vsub.s32 0, %v1024
      %v1120 = vsel %vm1118, %v1119, %v1024
      %v1121 = vshrl.u32 %v1120, 4
      %v1122 = vand.u32 %v1120, 15
      %v1123 = vsub.s32 0, %v1122
      %v1124 = vsel %vm1118, %v1123, %v1122
      %vm1125 = vcmp.lt.s32.totalorder %v1025, 0
      %v1126 = vsub.s32 0, %v1025
      %v1127 = vsel %vm1125, %v1126, %v1025
      %v1128 = vshrl.u32 %v1127, 4
      %v1129 = vand.u32 %v1127, 15
      %v1130 = vsub.s32 0, %v1129
      %v1131 = vsel %vm1125, %v1130, %v1129
      %vm1132 = vcmp.lt.s32.totalorder %v1026, 0
      %v1133 = vsub.s32 0, %v1026
      %v1134 = vsel %vm1132, %v1133, %v1026
      %v1135 = vshrl.u32 %v1134, 4
      %v1136 = vand.u32 %v1134, 15
      %v1137 = vsub.s32 0, %v1136
      %v1138 = vsel %vm1132, %v1137, %v1136
      %vm1139 = vcmp.ne.s32.totalorder %v1033, 0
      %vm1140 = vcmp.ne.s32.totalorder %v1040, 0
      %vm1141 = vcmp.ne.s32.totalorder %v1047, 0
      %vm1142 = vcmp.ne.s32.totalorder %v1054, 0
      %vm1143 = vcmp.ne.s32.totalorder %v1061, 0
      %vm1144 = vcmp.ne.s32.totalorder %v1068, 0
      %vm1145 = vcmp.ne.s32.totalorder %v1075, 0
      %vm1146 = vcmp.ne.s32.totalorder %v1082, 0
      %vm1147 = vcmp.ne.s32.totalorder %v1089, 0
      %vm1148 = vcmp.ne.s32.totalorder %v1096, 0
      %vm1149 = vcmp.ne.s32.totalorder %v1103, 0
      %vm1150 = vcmp.ne.s32.totalorder %v1110, 0
      %vm1151 = vcmp.ne.s32.totalorder %v1117, 0
      %vm1152 = vcmp.ne.s32.totalorder %v1124, 0
      %vm1153 = vcmp.ne.s32.totalorder %v1131, 0
      %vm1154 = vcmp.ne.s32.totalorder %v1138, 0
      %vm1155 = vcmp.lt.s32.totalorder %v1033, 0
      %vm1156 = vcmp.lt.s32.totalorder %v1040, 0
      %vm1157 = vcmp.lt.s32.totalorder %v1047, 0
      %vm1158 = vcmp.lt.s32.totalorder %v1054, 0
      %vm1159 = vcmp.lt.s32.totalorder %v1061, 0
      %vm1160 = vcmp.lt.s32.totalorder %v1068, 0
      %vm1161 = vcmp.lt.s32.totalorder %v1075, 0
      %vm1162 = vcmp.lt.s32.totalorder %v1082, 0
      %vm1163 = vcmp.lt.s32.totalorder %v1089, 0
      %vm1164 = vcmp.lt.s32.totalorder %v1096, 0
      %vm1165 = vcmp.lt.s32.totalorder %v1103, 0
      %vm1166 = vcmp.lt.s32.totalorder %v1110, 0
      %vm1167 = vcmp.lt.s32.totalorder %v1117, 0
      %vm1168 = vcmp.lt.s32.totalorder %v1124, 0
      %vm1169 = vcmp.lt.s32.totalorder %v1131, 0
      %vm1170 = vcmp.lt.s32.totalorder %v1138, 0
      %vm1171 = vmand %vm1155, %vm1139
      %vm1172 = vmand %vm1156, %vm1140
      %vm1173 = vmand %vm1157, %vm1141
      %vm1174 = vmand %vm1158, %vm1142
      %vm1175 = vmand %vm1159, %vm1143
      %vm1176 = vmand %vm1160, %vm1144
      %vm1177 = vmand %vm1161, %vm1145
      %vm1178 = vmand %vm1162, %vm1146
      %vm1179 = vmand %vm1163, %vm1147
      %vm1180 = vmand %vm1164, %vm1148
      %vm1181 = vmand %vm1165, %vm1149
      %vm1182 = vmand %vm1166, %vm1150
      %vm1183 = vmand %vm1167, %vm1151
      %vm1184 = vmand %vm1168, %vm1152
      %vm1185 = vmand %vm1169, %vm1153
      %vm1186 = vmand %vm1170, %vm1154
      %v1187 = vadd.s32 %v1033, 16
      %v1188 = vadd.s32 %v1040, 16
      %v1189 = vadd.s32 %v1047, 16
      %v1190 = vadd.s32 %v1054, 16
      %v1191 = vadd.s32 %v1061, 16
      %v1192 = vadd.s32 %v1068, 16
      %v1193 = vadd.s32 %v1075, 16
      %v1194 = vadd.s32 %v1082, 16
      %v1195 = vadd.s32 %v1089, 16
      %v1196 = vadd.s32 %v1096, 16
      %v1197 = vadd.s32 %v1103, 16
      %v1198 = vadd.s32 %v1110, 16
      %v1199 = vadd.s32 %v1117, 16
      %v1200 = vadd.s32 %v1124, 16
      %v1201 = vadd.s32 %v1131, 16
      %v1202 = vadd.s32 %v1138, 16
      %v1203 = vsel %vm1171, %v1187, %v1033
      %v1204 = vsel %vm1172, %v1188, %v1040
      %v1205 = vsel %vm1173, %v1189, %v1047
      %v1206 = vsel %vm1174, %v1190, %v1054
      %v1207 = vsel %vm1175, %v1191, %v1061
      %v1208 = vsel %vm1176, %v1192, %v1068
      %v1209 = vsel %vm1177, %v1193, %v1075
      %v1210 = vsel %vm1178, %v1194, %v1082
      %v1211 = vsel %vm1179, %v1195, %v1089
      %v1212 = vsel %vm1180, %v1196, %v1096
      %v1213 = vsel %vm1181, %v1197, %v1103
      %v1214 = vsel %vm1182, %v1198, %v1110
      %v1215 = vsel %vm1183, %v1199, %v1117
      %v1216 = vsel %vm1184, %v1200, %v1124
      %v1217 = vsel %vm1185, %v1201, %v1131
      %v1218 = vsel %vm1186, %v1202, %v1138
      %vm1219 = vcmp.lt.s32.totalorder %v1203, 8
      %vm1220 = vcmp.lt.s32.totalorder %v1204, 8
      %vm1221 = vcmp.lt.s32.totalorder %v1205, 8
      %vm1222 = vcmp.lt.s32.totalorder %v1206, 8
      %vm1223 = vcmp.lt.s32.totalorder %v1207, 8
      %vm1224 = vcmp.lt.s32.totalorder %v1208, 8
      %vm1225 = vcmp.lt.s32.totalorder %v1209, 8
      %vm1226 = vcmp.lt.s32.totalorder %v1210, 8
      %vm1227 = vcmp.lt.s32.totalorder %v1211, 8
      %vm1228 = vcmp.lt.s32.totalorder %v1212, 8
      %vm1229 = vcmp.lt.s32.totalorder %v1213, 8
      %vm1230 = vcmp.lt.s32.totalorder %v1214, 8
      %vm1231 = vcmp.lt.s32.totalorder %v1215, 8
      %vm1232 = vcmp.lt.s32.totalorder %v1216, 8
      %vm1233 = vcmp.lt.s32.totalorder %v1217, 8
      %vm1234 = vcmp.lt.s32.totalorder %v1218, 8
      %v1235 = vsel %vm1219, 1, 0
      %v1236 = vsel %vm1220, 1, 0
      %v1237 = vsel %vm1221, 1, 0
      %v1238 = vsel %vm1222, 1, 0
      %v1239 = vsel %vm1223, 1, 0
      %v1240 = vsel %vm1224, 1, 0
      %v1241 = vsel %vm1225, 1, 0
      %v1242 = vsel %vm1226, 1, 0
      %v1243 = vsel %vm1227, 1, 0
      %v1244 = vsel %vm1228, 1, 0
      %v1245 = vsel %vm1229, 1, 0
      %v1246 = vsel %vm1230, 1, 0
      %v1247 = vsel %vm1231, 1, 0
      %v1248 = vsel %vm1232, 1, 0
      %v1249 = vsel %vm1233, 1, 0
      %v1250 = vsel %vm1234, 1, 0
      %vm1251 = vcmp.eq.s32.totalorder %v1235, 1
      %vm1252 = vcmp.eq.s32.totalorder %v1236, 1
      %vm1253 = vcmp.eq.s32.totalorder %v1237, 1
      %vm1254 = vcmp.eq.s32.totalorder %v1238, 1
      %vm1255 = vcmp.eq.s32.totalorder %v1239, 1
      %vm1256 = vcmp.eq.s32.totalorder %v1240, 1
      %vm1257 = vcmp.eq.s32.totalorder %v1241, 1
      %vm1258 = vcmp.eq.s32.totalorder %v1242, 1
      %vm1259 = vcmp.eq.s32.totalorder %v1243, 1
      %vm1260 = vcmp.eq.s32.totalorder %v1244, 1
      %vm1261 = vcmp.eq.s32.totalorder %v1245, 1
      %vm1262 = vcmp.eq.s32.totalorder %v1246, 1
      %vm1263 = vcmp.eq.s32.totalorder %v1247, 1
      %vm1264 = vcmp.eq.s32.totalorder %v1248, 1
      %vm1265 = vcmp.eq.s32.totalorder %v1249, 1
      %vm1266 = vcmp.eq.s32.totalorder %v1250, 1
      %v1267 = vsel %vm1251, %v994, 0.0
      %v1268 = vsel %vm1252, %v995, 0.0
      %v1269 = vsel %vm1253, %v996, 0.0
      %v1270 = vsel %vm1254, %v997, 0.0
      %v1271 = vsel %vm1255, %v998, 0.0
      %v1272 = vsel %vm1256, %v999, 0.0
      %v1273 = vsel %vm1257, %v1000, 0.0
      %v1274 = vsel %vm1258, %v1001, 0.0
      %v1275 = vsel %vm1259, %v1002, 0.0
      %v1276 = vsel %vm1260, %v1003, 0.0
      %v1277 = vsel %vm1261, %v1004, 0.0
      %v1278 = vsel %vm1262, %v1005, 0.0
      %v1279 = vsel %vm1263, %v1006, 0.0
      %v1280 = vsel %vm1264, %v1007, 0.0
      %v1281 = vsel %vm1265, %v1008, 0.0
      %v1282 = vsel %vm1266, %v1009, 0.0
      %vm1283 = vcmask 64512
      %1284 = vst.msk [vmem:[#allocation3 + $0x11] sm:$0xff] %vm1283, %v1267
      %1285 = vst.msk [vmem:[#allocation3 + $0x19] sm:$0xff] %vm1283, %v1268
      %1286 = vst.msk [vmem:[#allocation3 + $0x21] sm:$0xff] %vm1283, %v1269
      %1287 = vst.msk [vmem:[#allocation3 + $0x29] sm:$0xff] %vm1283, %v1270
      %1288 = vst.msk [vmem:[#allocation3 + $0x31] sm:$0xff] %vm1283, %v1271
      %1289 = vst.msk [vmem:[#allocation3 + $0x39] sm:$0xff] %vm1283, %v1272
      %1290 = vst.msk [vmem:[#allocation3 + $0x41] sm:$0xff] %vm1283, %v1273
      %1291 = vst.msk [vmem:[#allocation3 + $0x49] sm:$0xff] %vm1283, %v1274
      %1292 = vst.msk [vmem:[#allocation3 + $0x51] sm:$0xff] %vm1283, %v1275
      %1293 = vst.msk [vmem:[#allocation3 + $0x59] sm:$0xff] %vm1283, %v1276
      %1294 = vst.msk [vmem:[#allocation3 + $0x61] sm:$0xff] %vm1283, %v1277
      %1295 = vst.msk [vmem:[#allocation3 + $0x69] sm:$0xff] %vm1283, %v1278
      %1296 = vst.msk [vmem:[#allocation3 + $0x71] sm:$0xff] %vm1283, %v1279
      %1297 = vst.msk [vmem:[#allocation3 + $0x79] sm:$0xff] %vm1283, %v1280
      %1298 = vst.msk [vmem:[#allocation3 + $0x81] sm:$0xff] %vm1283, %v1281
      %1299 = vst.msk [vmem:[#allocation3 + $0x89] sm:$0xff] %vm1283, %v1282
      %1316 = vrot.lane.b32.xlu0 %v1267, 8
      %v1317 = vpop.permute.xlu0 %1316
      %1318 = vrot.lane.b32.xlu0 %v1268, 8
      %v1319 = vpop.permute.xlu0 %1318
      %1320 = vrot.lane.b32.xlu0 %v1269, 8
      %v1321 = vpop.permute.xlu0 %1320
      %1322 = vrot.lane.b32.xlu0 %v1270, 8
      %v1323 = vpop.permute.xlu0 %1322
      %1324 = vrot.lane.b32.xlu0 %v1271, 8
      %v1325 = vpop.permute.xlu0 %1324
      %1326 = vrot.lane.b32.xlu0 %v1272, 8
      %v1327 = vpop.permute.xlu0 %1326
      %1328 = vrot.lane.b32.xlu0 %v1273, 8
      %v1329 = vpop.permute.xlu0 %1328
      %1330 = vrot.lane.b32.xlu0 %v1274, 8
      %v1331 = vpop.permute.xlu0 %1330
      %1332 = vrot.lane.b32.xlu0 %v1275, 8
      %v1333 = vpop.permute.xlu0 %1332
      %1334 = vrot.lane.b32.xlu0 %v1276, 8
      %v1335 = vpop.permute.xlu0 %1334
      %1336 = vrot.lane.b32.xlu0 %v1277, 8
      %v1337 = vpop.permute.xlu0 %1336
      %1338 = vrot.lane.b32.xlu0 %v1278, 8
      %v1339 = vpop.permute.xlu0 %1338
      %1340 = vrot.lane.b32.xlu0 %v1279, 8
      %v1341 = vpop.permute.xlu0 %1340
      %1342 = vrot.lane.b32.xlu0 %v1280, 8
      %v1343 = vpop.permute.xlu0 %1342
      %1344 = vrot.lane.b32.xlu0 %v1281, 8
      %v1345 = vpop.permute.xlu0 %1344
      %1346 = vrot.lane.b32.xlu0 %v1282, 8
      %v1347 = vpop.permute.xlu0 %1346
      %vm1364 = vcmask 130112
      %1365 = vst.msk [vmem:[#allocation3 + $0x10] sm:$0xff] %vm1364, %v1317
      %1366 = vst.msk [vmem:[#allocation3 + $0x18] sm:$0xff] %vm1364, %v1319
      %1367 = vst.msk [vmem:[#allocation3 + $0x20] sm:$0xff] %vm1364, %v1321
      %1368 = vst.msk [vmem:[#allocation3 + $0x28] sm:$0xff] %vm1364, %v1323
      %1369 = vst.msk [vmem:[#allocation3 + $0x30] sm:$0xff] %vm1364, %v1325
      %1370 = vst.msk [vmem:[#allocation3 + $0x38] sm:$0xff] %vm1364, %v1327
      %1371 = vst.msk [vmem:[#allocation3 + $0x40] sm:$0xff] %vm1364, %v1329
      %1372 = vst.msk [vmem:[#allocation3 + $0x48] sm:$0xff] %vm1364, %v1331
      %1373 = vst.msk [vmem:[#allocation3 + $0x50] sm:$0xff] %vm1364, %v1333
      %1374 = vst.msk [vmem:[#allocation3 + $0x58] sm:$0xff] %vm1364, %v1335
      %1375 = vst.msk [vmem:[#allocation3 + $0x60] sm:$0xff] %vm1364, %v1337
      %1376 = vst.msk [vmem:[#allocation3 + $0x68] sm:$0xff] %vm1364, %v1339
      %1377 = vst.msk [vmem:[#allocation3 + $0x70] sm:$0xff] %vm1364, %v1341
      %1378 = vst.msk [vmem:[#allocation3 + $0x78] sm:$0xff] %vm1364, %v1343
      %1379 = vst.msk [vmem:[#allocation3 + $0x80] sm:$0xff] %vm1364, %v1345
      %1380 = vst.msk [vmem:[#allocation3 + $0x88] sm:$0xff] %vm1364, %v1347
      %1381 = vrot.lane.b32.xlu0 %v1267, 16
      %v1382 = vpop.permute.xlu0 %1381
      %1383 = vrot.lane.b32.xlu0 %v1268, 16
      %v1384 = vpop.permute.xlu0 %1383
      %1385 = vrot.lane.b32.xlu0 %v1269, 16
      %v1386 = vpop.permute.xlu0 %1385
      %1387 = vrot.lane.b32.xlu0 %v1270, 16
      %v1388 = vpop.permute.xlu0 %1387
      %1389 = vrot.lane.b32.xlu0 %v1271, 16
      %v1390 = vpop.permute.xlu0 %1389
      %1391 = vrot.lane.b32.xlu0 %v1272, 16
      %v1392 = vpop.permute.xlu0 %1391
      %1393 = vrot.lane.b32.xlu0 %v1273, 16
      %v1394 = vpop.permute.xlu0 %1393
      %1395 = vrot.lane.b32.xlu0 %v1274, 16
      %v1396 = vpop.permute.xlu0 %1395
      %1397 = vrot.lane.b32.xlu0 %v1275, 16
      %v1398 = vpop.permute.xlu0 %1397
      %1399 = vrot.lane.b32.xlu0 %v1276, 16
      %v1400 = vpop.permute.xlu0 %1399
      %1401 = vrot.lane.b32.xlu0 %v1277, 16
      %v1402 = vpop.permute.xlu0 %1401
      %1403 = vrot.lane.b32.xlu0 %v1278, 16
      %v1404 = vpop.permute.xlu0 %1403
      %1405 = vrot.lane.b32.xlu0 %v1279, 16
      %v1406 = vpop.permute.xlu0 %1405
      %1407 = vrot.lane.b32.xlu0 %v1280, 16
      %v1408 = vpop.permute.xlu0 %1407
      %1409 = vrot.lane.b32.xlu0 %v1281, 16
      %v1410 = vpop.permute.xlu0 %1409
      %1411 = vrot.lane.b32.xlu0 %v1282, 16
      %v1412 = vpop.permute.xlu0 %1411
      %vm1429 = vcmask 195712
      %1430 = vst.msk [vmem:[#allocation3 + $0xf] sm:$0xff] %vm1429, %v1382
      %1431 = vst.msk [vmem:[#allocation3 + $0x17] sm:$0xff] %vm1429, %v1384
      %1432 = vst.msk [vmem:[#allocation3 + $0x1f] sm:$0xff] %vm1429, %v1386
      %1433 = vst.msk [vmem:[#allocation3 + $0x27] sm:$0xff] %vm1429, %v1388
      %1434 = vst.msk [vmem:[#allocation3 + $0x2f] sm:$0xff] %vm1429, %v1390
      %1435 = vst.msk [vmem:[#allocation3 + $0x37] sm:$0xff] %vm1429, %v1392
      %1436 = vst.msk [vmem:[#allocation3 + $0x3f] sm:$0xff] %vm1429, %v1394
      %1437 = vst.msk [vmem:[#allocation3 + $0x47] sm:$0xff] %vm1429, %v1396
      %1438 = vst.msk [vmem:[#allocation3 + $0x4f] sm:$0xff] %vm1429, %v1398
      %1439 = vst.msk [vmem:[#allocation3 + $0x57] sm:$0xff] %vm1429, %v1400
      %1440 = vst.msk [vmem:[#allocation3 + $0x5f] sm:$0xff] %vm1429, %v1402
      %1441 = vst.msk [vmem:[#allocation3 + $0x67] sm:$0xff] %vm1429, %v1404
      %1442 = vst.msk [vmem:[#allocation3 + $0x6f] sm:$0xff] %vm1429, %v1406
      %1443 = vst.msk [vmem:[#allocation3 + $0x77] sm:$0xff] %vm1429, %v1408
      %1444 = vst.msk [vmem:[#allocation3 + $0x7f] sm:$0xff] %vm1429, %v1410
      %1445 = vst.msk [vmem:[#allocation3 + $0x87] sm:$0xff] %vm1429, %v1412
      %v1446 = vld [vmem:[#allocation3] sm:$0xff]
      %v1447 = vld [vmem:[#allocation3 + $0x8] sm:$0xff]
      %v1448 = vld [vmem:[#allocation3 + $0x10] sm:$0xff]
      %v1449 = vld [vmem:[#allocation3 + $0x18] sm:$0xff]
      %v1450 = vld [vmem:[#allocation3 + $0x20] sm:$0xff]
      %v1451 = vld [vmem:[#allocation3 + $0x28] sm:$0xff]
      %v1452 = vld [vmem:[#allocation3 + $0x30] sm:$0xff]
      %v1453 = vld [vmem:[#allocation3 + $0x38] sm:$0xff]
      %v1454 = vld [vmem:[#allocation3 + $0x40] sm:$0xff]
      %v1455 = vld [vmem:[#allocation3 + $0x48] sm:$0xff]
      %v1456 = vld [vmem:[#allocation3 + $0x50] sm:$0xff]
      %v1457 = vld [vmem:[#allocation3 + $0x58] sm:$0xff]
      %v1458 = vld [vmem:[#allocation3 + $0x60] sm:$0xff]
      %v1459 = vld [vmem:[#allocation3 + $0x68] sm:$0xff]
      %v1460 = vld [vmem:[#allocation3 + $0x70] sm:$0xff]
      %v1461 = vld [vmem:[#allocation3 + $0x78] sm:$0xff]
      %v1462 = vpack.c.bf16 %v1447, %v1446
      %v1463 = vpack.c.bf16 %v1449, %v1448
      %v1464 = vpack.c.bf16 %v1451, %v1450
      %v1465 = vpack.c.bf16 %v1453, %v1452
      %v1466 = vpack.c.bf16 %v1455, %v1454
      %v1467 = vpack.c.bf16 %v1457, %v1456
      %v1468 = vpack.c.bf16 %v1459, %v1458
      %v1469 = vpack.c.bf16 %v1461, %v1460
      %v1470 = vld [vmem:[%s4] sm:$0xf]
      %v1471 = vld [vmem:[%s4 + $0x4] sm:$0xf]
      %v1472 = vld [vmem:[%s4 + $0x8] sm:$0xf]
      %v1473 = vld [vmem:[#allocation3 + $0x80] sm:$0xff]
      %v1474 = vld [vmem:[#allocation3 + $0x88] sm:$0xff]
      %v1475 = vpack.c.bf16 %v1474, %v1473
      %s1476 = scalar_lea.vmem %s4, 12
      %v1477 = vld [vmem:[%s1476] sm:$0xf]
      %v1478 = vld [vmem:[%s1476 + $0x4] sm:$0xf]
      %v1479 = vld [vmem:[%s1476 + $0x8] sm:$0xf]
      %v1483 = vunpack.c.l.b16 %v1477
      %v1484 = vunpack.c.l.b16 %v1478
      %v1485 = vunpack.c.l.b16 %v1479
      %v1486 = vpack.c.b16 %v1484, %v1483
      %v1487 = vpack.c.b16 %v1485, %v1485
      %v1490 = vsel %vm288, %v1463, 0
      %v1493 = vsel %vm288, %v1464, 0
      %v1496 = vsel %vm288, %v1465, 0
      %v1499 = vsel %vm288, %v1466, 0
      %v1502 = vsel %vm288, %v1467, 0
      %v1505 = vsel %vm288, %v1468, 0
      %v1508 = vsel %vm288, %v1469, 0
      %v1511 = vsel %vm288, %v1475, 0
      %vm1513 = vcmask 1043456
      %v1515 = vsel %vm1513, %v1487, 0
      %1517 = vmatprep.subr.bf16.mxu0 0
      %1518 = vmatpush1.bf16.msra.mxu0 0
      %1519 = vmatprep.subr.bf16.mxu0 0
      %1520 = vmatpush1.bf16.msra.mxu0 0
      %1521 = vmatprep.subr.bf16.mxu0 0
      %1522 = vmatpush1.bf16.msra.mxu0 0
      %1523 = vmatprep.subr.bf16.mxu0 0
      %1524 = vmatpush1.bf16.msra.mxu0 0
      %1525 = vmatprep.subr.bf16.mxu0 0
      %1526 = vmatpush1.bf16.msra.mxu0 0
      %1527 = vmatprep.subr.bf16.mxu0 0
      %1528 = vmatpush1.bf16.msra.mxu0 0
      %1529 = vmatprep.subr.bf16.mxu0 0
      %1530 = vmatpush1.bf16.msra.mxu0 %v1515
      %1531 = vmatprep.subr.bf16.mxu0 0
      %1532 = vmatpush1.bf16.msra.mxu0 %v1486
      %1533 = vmatprep.subr.bf16.mxu0 0
      %1534 = vmatpush2.bf16.msra.mxu0 0
      %1535 = vmatprep.subr.bf16.mxu0 0
      %1536 = vmatpush2.bf16.msra.mxu0 0
      %1537 = vmatprep.subr.bf16.mxu0 0
      %1538 = vmatpush2.bf16.msra.mxu0 0
      %1539 = vmatprep.subr.bf16.mxu0 0
      %1540 = vmatpush2.bf16.msra.mxu0 0
      %1541 = vmatprep.subr.bf16.mxu0 0
      %1542 = vmatpush2.bf16.msra.mxu0 0
      %1543 = vmatprep.subr.bf16.mxu0 0
      %1544 = vmatpush2.bf16.msra.mxu0 0
      %1545 = vmatprep.subr.bf16.mxu0 0
      %1546 = vmatpush2.bf16.msra.mxu0 0
      %1547 = vmatprep.subr.bf16.mxu0 0
      %1548 = vmatpush2.bf16.msra.mxu0 0
      %1549 = vmatprep.mubr.bf16.mxu0 0
      %1550 = vmatmul.mubr.bf16.gmra.mxu0 %v1490
      %v1551 = vpop.f32.mrf.mxu0
      %v1552 = vadd.f32 0.0, %v1551
      %v1553 = vpop.f32.mrf.mxu0
      %v1554 = vpop.f32.mrf.mxu0
      %v1555 = vadd.f32 0.0, %v1554
      %v1556 = vpop.f32.mrf.mxu0
      %1557 = vmatprep.mubr.bf16.mxu0 0
      %1558 = vmatmul.mubr.bf16.gmra.mxu0 %v1493
      %v1559 = vpop.f32.mrf.mxu0
      %v1560 = vadd.f32 0.0, %v1559
      %v1561 = vpop.f32.mrf.mxu0
      %v1562 = vpop.f32.mrf.mxu0
      %v1563 = vadd.f32 0.0, %v1562
      %v1564 = vpop.f32.mrf.mxu0
      %1565 = vmatprep.mubr.bf16.mxu0 0
      %1566 = vmatmul.mubr.bf16.gmra.mxu0 %v1496
      %v1567 = vpop.f32.mrf.mxu0
      %v1568 = vadd.f32 0.0, %v1567
      %v1569 = vpop.f32.mrf.mxu0
      %v1570 = vpop.f32.mrf.mxu0
      %v1571 = vadd.f32 0.0, %v1570
      %v1572 = vpop.f32.mrf.mxu0
      %1573 = vmatprep.mubr.bf16.mxu0 0
      %1574 = vmatmul.mubr.bf16.gmra.mxu0 %v1499
      %v1575 = vpop.f32.mrf.mxu0
      %v1576 = vadd.f32 0.0, %v1575
      %v1577 = vpop.f32.mrf.mxu0
      %v1578 = vpop.f32.mrf.mxu0
      %v1579 = vadd.f32 0.0, %v1578
      %v1580 = vpop.f32.mrf.mxu0
      %1581 = vmatprep.mubr.bf16.mxu0 0
      %1582 = vmatmul.mubr.bf16.gmra.mxu0 %v1502
      %v1583 = vpop.f32.mrf.mxu0
      %v1584 = vadd.f32 0.0, %v1583
      %v1585 = vpop.f32.mrf.mxu0
      %v1586 = vpop.f32.mrf.mxu0
      %v1587 = vadd.f32 0.0, %v1586
      %v1588 = vpop.f32.mrf.mxu0
      %1589 = vmatprep.mubr.bf16.mxu0 0
      %1590 = vmatmul.mubr.bf16.gmra.mxu0 %v1505
      %v1591 = vpop.f32.mrf.mxu0
      %v1592 = vadd.f32 0.0, %v1591
      %v1593 = vpop.f32.mrf.mxu0
      %v1594 = vpop.f32.mrf.mxu0
      %v1595 = vadd.f32 0.0, %v1594
      %v1596 = vpop.f32.mrf.mxu0
      %1597 = vmatprep.mubr.bf16.mxu0 0
      %1598 = vmatmul.mubr.bf16.gmra.mxu0 %v1508
      %v1599 = vpop.f32.mrf.mxu0
      %v1600 = vadd.f32 0.0, %v1599
      %v1601 = vpop.f32.mrf.mxu0
      %v1602 = vpop.f32.mrf.mxu0
      %v1603 = vadd.f32 0.0, %v1602
      %v1604 = vpop.f32.mrf.mxu0
      %1605 = vmatprep.mubr.bf16.mxu0 0
      %1606 = vmatmul.mubr.bf16.gmra.mxu0 %v1511
      %v1607 = vpop.f32.mrf.mxu0
      %v1608 = vadd.f32 0.0, %v1607
      %v1609 = vpop.f32.mrf.mxu0
      %v1610 = vpop.f32.mrf.mxu0
      %v1611 = vadd.f32 0.0, %v1610
      %v1612 = vpop.f32.mrf.mxu0
      %1613 = vdwg.mxu0
      %v1617 = vunpack.c.l.b16 %v1470
      %v1618 = vunpack.c.l.b16 %v1471
      %v1619 = vunpack.c.l.b16 %v1472
      %v1620 = vpack.c.b16 %v1618, %v1617
      %v1621 = vpack.c.b16 %v1619, %v1619
      %v1624 = vsel %vm288, %v1462, 0
      %v1627 = vsel %vm1513, %v1621, 0
      %1629 = vmatprep.subr.bf16.mxu0 0
      %1630 = vmatpush1.bf16.msra.mxu0 0
      %1631 = vmatprep.subr.bf16.mxu0 0
      %1632 = vmatpush1.bf16.msra.mxu0 0
      %1633 = vmatprep.subr.bf16.mxu0 0
      %1634 = vmatpush1.bf16.msra.mxu0 0
      %1635 = vmatprep.subr.bf16.mxu0 0
      %1636 = vmatpush1.bf16.msra.mxu0 0
      %1637 = vmatprep.subr.bf16.mxu0 0
      %1638 = vmatpush1.bf16.msra.mxu0 0
      %1639 = vmatprep.subr.bf16.mxu0 0
      %1640 = vmatpush1.bf16.msra.mxu0 0
      %1641 = vmatprep.subr.bf16.mxu0 0
      %1642 = vmatpush1.bf16.msra.mxu0 %v1627
      %1643 = vmatprep.subr.bf16.mxu0 0
      %1644 = vmatpush1.bf16.msra.mxu0 %v1620
      %1645 = vmatprep.subr.bf16.mxu0 0
      %1646 = vmatpush2.bf16.msra.mxu0 0
      %1647 = vmatprep.subr.bf16.mxu0 0
      %1648 = vmatpush2.bf16.msra.mxu0 0
      %1649 = vmatprep.subr.bf16.mxu0 0
      %1650 = vmatpush2.bf16.msra.mxu0 0
      %1651 = vmatprep.subr.bf16.mxu0 0
      %1652 = vmatpush2.bf16.msra.mxu0 0
      %1653 = vmatprep.subr.bf16.mxu0 0
      %1654 = vmatpush2.bf16.msra.mxu0 0
      %1655 = vmatprep.subr.bf16.mxu0 0
      %1656 = vmatpush2.bf16.msra.mxu0 0
      %1657 = vmatprep.subr.bf16.mxu0 0
      %1658 = vmatpush2.bf16.msra.mxu0 0
      %1659 = vmatprep.subr.bf16.mxu0 0
      %1660 = vmatpush2.bf16.msra.mxu0 0
      %1661 = vmatprep.mubr.bf16.mxu0 0
      %1662 = vmatmul.mubr.bf16.gmra.mxu0 %v1624
      %v1663 = vpop.f32.mrf.mxu0
      %v1664 = vadd.f32 %v1552, %v1663
      %v1665 = vpop.f32.mrf.mxu0
      %v1666 = vpop.f32.mrf.mxu0
      %v1667 = vadd.f32 %v1555, %v1666
      %v1668 = vpop.f32.mrf.mxu0
      %1669 = vmatprep.mubr.bf16.mxu0 0
      %1670 = vmatmul.mubr.bf16.gmra.mxu0 %v1490
      %v1671 = vpop.f32.mrf.mxu0
      %v1672 = vadd.f32 %v1560, %v1671
      %v1673 = vpop.f32.mrf.mxu0
      %v1674 = vpop.f32.mrf.mxu0
      %v1675 = vadd.f32 %v1563, %v1674
      %v1676 = vpop.f32.mrf.mxu0
      %1677 = vmatprep.mubr.bf16.mxu0 0
      %1678 = vmatmul.mubr.bf16.gmra.mxu0 %v1493
      %v1679 = vpop.f32.mrf.mxu0
      %v1680 = vadd.f32 %v1568, %v1679
      %v1681 = vpop.f32.mrf.mxu0
      %v1682 = vpop.f32.mrf.mxu0
      %v1683 = vadd.f32 %v1571, %v1682
      %v1684 = vpop.f32.mrf.mxu0
      %1685 = vmatprep.mubr.bf16.mxu0 0
      %1686 = vmatmul.mubr.bf16.gmra.mxu0 %v1496
      %v1687 = vpop.f32.mrf.mxu0
      %v1688 = vadd.f32 %v1576, %v1687
      %v1689 = vpop.f32.mrf.mxu0
      %v1690 = vpop.f32.mrf.mxu0
      %v1691 = vadd.f32 %v1579, %v1690
      %v1692 = vpop.f32.mrf.mxu0
      %1693 = vmatprep.mubr.bf16.mxu0 0
      %1694 = vmatmul.mubr.bf16.gmra.mxu0 %v1499
      %v1695 = vpop.f32.mrf.mxu0
      %v1696 = vadd.f32 %v1584, %v1695
      %v1697 = vpop.f32.mrf.mxu0
      %v1698 = vpop.f32.mrf.mxu0
      %v1699 = vadd.f32 %v1587, %v1698
      %v1700 = vpop.f32.mrf.mxu0
      %1701 = vmatprep.mubr.bf16.mxu0 0
      %1702 = vmatmul.mubr.bf16.gmra.mxu0 %v1502
      %v1703 = vpop.f32.mrf.mxu0
      %v1704 = vadd.f32 %v1592, %v1703
      %v1705 = vpop.f32.mrf.mxu0
      %v1706 = vpop.f32.mrf.mxu0
      %v1707 = vadd.f32 %v1595, %v1706
      %v1708 = vpop.f32.mrf.mxu0
      %1709 = vmatprep.mubr.bf16.mxu0 0
      %1710 = vmatmul.mubr.bf16.gmra.mxu0 %v1505
      %v1711 = vpop.f32.mrf.mxu0
      %v1712 = vadd.f32 %v1600, %v1711
      %v1713 = vpop.f32.mrf.mxu0
      %v1714 = vpop.f32.mrf.mxu0
      %v1715 = vadd.f32 %v1603, %v1714
      %v1716 = vpop.f32.mrf.mxu0
      %1717 = vmatprep.mubr.bf16.mxu0 0
      %1718 = vmatmul.mubr.bf16.gmra.mxu0 %v1508
      %v1719 = vpop.f32.mrf.mxu0
      %v1720 = vadd.f32 %v1608, %v1719
      %v1721 = vpop.f32.mrf.mxu0
      %v1722 = vpop.f32.mrf.mxu0
      %v1723 = vadd.f32 %v1611, %v1722
      %v1724 = vpop.f32.mrf.mxu0
      %1725 = vdwg.mxu0
      %v1726 = vld [vmem:[#allocation3 + $0x20] sm:$0xff]
      %v1727 = vld [vmem:[#allocation3 + $0x28] sm:$0xff]
      %v1728 = vld [vmem:[#allocation3 + $0x30] sm:$0xff]
      %v1729 = vld [vmem:[#allocation3 + $0x38] sm:$0xff]
      %v1730 = vld [vmem:[#allocation3 + $0x40] sm:$0xff]
      %v1731 = vld [vmem:[#allocation3 + $0x48] sm:$0xff]
      %v1732 = vld [vmem:[#allocation3 + $0x50] sm:$0xff]
      %v1733 = vld [vmem:[#allocation3 + $0x58] sm:$0xff]
      %v1734 = vld [vmem:[#allocation3 + $0x60] sm:$0xff]
      %v1735 = vld [vmem:[#allocation3 + $0x68] sm:$0xff]
      %v1736 = vld [vmem:[#allocation3 + $0x70] sm:$0xff]
      %v1737 = vld [vmem:[#allocation3 + $0x78] sm:$0xff]
      %v1738 = vld [vmem:[#allocation3 + $0x80] sm:$0xff]
      %v1739 = vld [vmem:[#allocation3 + $0x88] sm:$0xff]
      %v1740 = vld [vmem:[#allocation3 + $0x90] sm:$0xff]
      %v1741 = vld [vmem:[#allocation3 + $0x98] sm:$0xff]
      %v1742 = vpack.c.bf16 %v1727, %v1726
      %v1743 = vpack.c.bf16 %v1729, %v1728
      %v1744 = vpack.c.bf16 %v1731, %v1730
      %v1745 = vpack.c.bf16 %v1733, %v1732
      %v1746 = vpack.c.bf16 %v1735, %v1734
      %v1747 = vpack.c.bf16 %v1737, %v1736
      %v1748 = vpack.c.bf16 %v1739, %v1738
      %v1749 = vpack.c.bf16 %v1741, %v1740
      %s1750 = scalar_lea.vmem %s4, 24
      %v1751 = vld [vmem:[%s1750] sm:$0xf]
      %v1752 = vld [vmem:[%s1750 + $0x4] sm:$0xf]
      %v1753 = vld [vmem:[%s1750 + $0x8] sm:$0xf]
      %v1757 = vunpack.c.l.b16 %v1751
      %v1758 = vunpack.c.l.b16 %v1752
      %v1759 = vunpack.c.l.b16 %v1753
      %v1760 = vpack.c.b16 %v1758, %v1757
      %v1761 = vpack.c.b16 %v1759, %v1759
      %v1764 = vsel %vm288, %v1742, 0
      %v1767 = vsel %vm288, %v1743, 0
      %v1770 = vsel %vm288, %v1744, 0
      %v1773 = vsel %vm288, %v1745, 0
      %v1776 = vsel %vm288, %v1746, 0
      %v1779 = vsel %vm288, %v1747, 0
      %v1782 = vsel %vm288, %v1748, 0
      %v1785 = vsel %vm288, %v1749, 0
      %v1788 = vsel %vm1513, %v1761, 0
      %1790 = vmatprep.subr.bf16.mxu0 0
      %1791 = vmatpush1.bf16.msra.mxu0 0
      %1792 = vmatprep.subr.bf16.mxu0 0
      %1793 = vmatpush1.bf16.msra.mxu0 0
      %1794 = vmatprep.subr.bf16.mxu0 0
      %1795 = vmatpush1.bf16.msra.mxu0 0
      %1796 = vmatprep.subr.bf16.mxu0 0
      %1797 = vmatpush1.bf16.msra.mxu0 0
      %1798 = vmatprep.subr.bf16.mxu0 0
      %1799 = vmatpush1.bf16.msra.mxu0 0
      %1800 = vmatprep.subr.bf16.mxu0 0
      %1801 = vmatpush1.bf16.msra.mxu0 0
      %1802 = vmatprep.subr.bf16.mxu0 0
      %1803 = vmatpush1.bf16.msra.mxu0 %v1788
      %1804 = vmatprep.subr.bf16.mxu0 0
      %1805 = vmatpush1.bf16.msra.mxu0 %v1760
      %1806 = vmatprep.subr.bf16.mxu0 0
      %1807 = vmatpush2.bf16.msra.mxu0 0
      %1808 = vmatprep.subr.bf16.mxu0 0
      %1809 = vmatpush2.bf16.msra.mxu0 0
      %1810 = vmatprep.subr.bf16.mxu0 0
      %1811 = vmatpush2.bf16.msra.mxu0 0
      %1812 = vmatprep.subr.bf16.mxu0 0
      %1813 = vmatpush2.bf16.msra.mxu0 0
      %1814 = vmatprep.subr.bf16.mxu0 0
      %1815 = vmatpush2.bf16.msra.mxu0 0
      %1816 = vmatprep.subr.bf16.mxu0 0
      %1817 = vmatpush2.bf16.msra.mxu0 0
      %1818 = vmatprep.subr.bf16.mxu0 0
      %1819 = vmatpush2.bf16.msra.mxu0 0
      %1820 = vmatprep.subr.bf16.mxu0 0
      %1821 = vmatpush2.bf16.msra.mxu0 0
      %1822 = vmatprep.mubr.bf16.mxu0 0
      %1823 = vmatmul.mubr.bf16.gmra.mxu0 %v1764
      %v1824 = vpop.f32.mrf.mxu0
      %v1825 = vadd.f32 0.0, %v1824
      %v1826 = vpop.f32.mrf.mxu0
      %v1827 = vpop.f32.mrf.mxu0
      %v1828 = vadd.f32 0.0, %v1827
      %v1829 = vpop.f32.mrf.mxu0
      %1830 = vmatprep.mubr.bf16.mxu0 0
      %1831 = vmatmul.mubr.bf16.gmra.mxu0 %v1767
      %v1832 = vpop.f32.mrf.mxu0
      %v1833 = vadd.f32 0.0, %v1832
      %v1834 = vpop.f32.mrf.mxu0
      %v1835 = vpop.f32.mrf.mxu0
      %v1836 = vadd.f32 0.0, %v1835
      %v1837 = vpop.f32.mrf.mxu0
      %1838 = vmatprep.mubr.bf16.mxu0 0
      %1839 = vmatmul.mubr.bf16.gmra.mxu0 %v1770
      %v1840 = vpop.f32.mrf.mxu0
      %v1841 = vadd.f32 0.0, %v1840
      %v1842 = vpop.f32.mrf.mxu0
      %v1843 = vpop.f32.mrf.mxu0
      %v1844 = vadd.f32 0.0, %v1843
      %v1845 = vpop.f32.mrf.mxu0
      %1846 = vmatprep.mubr.bf16.mxu0 0
      %1847 = vmatmul.mubr.bf16.gmra.mxu0 %v1773
      %v1848 = vpop.f32.mrf.mxu0
      %v1849 = vadd.f32 0.0, %v1848
      %v1850 = vpop.f32.mrf.mxu0
      %v1851 = vpop.f32.mrf.mxu0
      %v1852 = vadd.f32 0.0, %v1851
      %v1853 = vpop.f32.mrf.mxu0
      %1854 = vmatprep.mubr.bf16.mxu0 0
      %1855 = vmatmul.mubr.bf16.gmra.mxu0 %v1776
      %v1856 = vpop.f32.mrf.mxu0
      %v1857 = vadd.f32 0.0, %v1856
      %v1858 = vpop.f32.mrf.mxu0
      %v1859 = vpop.f32.mrf.mxu0
      %v1860 = vadd.f32 0.0, %v1859
      %v1861 = vpop.f32.mrf.mxu0
      %1862 = vmatprep.mubr.bf16.mxu0 0
      %1863 = vmatmul.mubr.bf16.gmra.mxu0 %v1779
      %v1864 = vpop.f32.mrf.mxu0
      %v1865 = vadd.f32 0.0, %v1864
      %v1866 = vpop.f32.mrf.mxu0
      %v1867 = vpop.f32.mrf.mxu0
      %v1868 = vadd.f32 0.0, %v1867
      %v1869 = vpop.f32.mrf.mxu0
      %1870 = vmatprep.mubr.bf16.mxu0 0
      %1871 = vmatmul.mubr.bf16.gmra.mxu0 %v1782
      %v1872 = vpop.f32.mrf.mxu0
      %v1873 = vadd.f32 0.0, %v1872
      %v1874 = vpop.f32.mrf.mxu0
      %v1875 = vpop.f32.mrf.mxu0
      %v1876 = vadd.f32 0.0, %v1875
      %v1877 = vpop.f32.mrf.mxu0
      %1878 = vmatprep.mubr.bf16.mxu0 0
      %1879 = vmatmul.mubr.bf16.gmra.mxu0 %v1785
      %v1880 = vpop.f32.mrf.mxu0
      %v1881 = vadd.f32 0.0, %v1880
      %v1882 = vpop.f32.mrf.mxu0
      %v1883 = vpop.f32.mrf.mxu0
      %v1884 = vadd.f32 0.0, %v1883
      %v1885 = vpop.f32.mrf.mxu0
      %1886 = vdwg.mxu0
      %v1887 = vadd.f32 %v1664, %v1825
      %v1888 = vadd.f32 %v1667, %v1828
      %v1889 = vadd.f32 %v1672, %v1833
      %v1890 = vadd.f32 %v1675, %v1836
      %v1891 = vadd.f32 %v1680, %v1841
      %v1892 = vadd.f32 %v1683, %v1844
      %v1893 = vadd.f32 %v1688, %v1849
      %v1894 = vadd.f32 %v1691, %v1852
      %v1895 = vadd.f32 %v1696, %v1857
      %v1896 = vadd.f32 %v1699, %v1860
      %v1897 = vadd.f32 %v1704, %v1865
      %v1898 = vadd.f32 %v1707, %v1868
      %v1899 = vadd.f32 %v1712, %v1873
      %v1900 = vadd.f32 %v1715, %v1876
      %v1901 = vadd.f32 %v1720, %v1881
      %v1902 = vadd.f32 %v1723, %v1884
      %v1903 = vld [vmem:[%s5] sm:$0x1]
      %v1905 = vlaneseq
      %v1906 = vshrl.u32 %v1905, 7
      %v1907 = vsub.s32 0, %v1906
      %v1908 = vrot.slane %v1903, %v1907
      %v1910 = vmul.f32 %v1887, %v1908
      %v1911 = vmul.f32 %v1888, %v1908
      %v1912 = vmul.f32 %v1889, %v1908
      %v1913 = vmul.f32 %v1890, %v1908
      %v1914 = vmul.f32 %v1891, %v1908
      %v1915 = vmul.f32 %v1892, %v1908
      %v1916 = vmul.f32 %v1893, %v1908
      %v1917 = vmul.f32 %v1894, %v1908
      %v1918 = vmul.f32 %v1895, %v1908
      %v1919 = vmul.f32 %v1896, %v1908
      %v1920 = vmul.f32 %v1897, %v1908
      %v1921 = vmul.f32 %v1898, %v1908
      %v1922 = vmul.f32 %v1899, %v1908
      %v1923 = vmul.f32 %v1900, %v1908
      %v1924 = vmul.f32 %v1901, %v1908
      %v1925 = vmul.f32 %v1902, %v1908
      %v1926 = vld [vmem:[%s6] sm:$0x1]
      %v1928 = vlaneseq
      %v1929 = vshrl.u32 %v1928, 7
      %v1930 = vsub.s32 0, %v1929
      %v1931 = vrot.slane %v1926, %v1930
      %v1933 = vadd.f32 %v1910, %v1931
      %v1934 = vadd.f32 %v1911, %v1931
      %v1935 = vadd.f32 %v1912, %v1931
      %v1936 = vadd.f32 %v1913, %v1931
      %v1937 = vadd.f32 %v1914, %v1931
      %v1938 = vadd.f32 %v1915, %v1931
      %v1939 = vadd.f32 %v1916, %v1931
      %v1940 = vadd.f32 %v1917, %v1931
      %v1941 = vadd.f32 %v1918, %v1931
      %v1942 = vadd.f32 %v1919, %v1931
      %v1943 = vadd.f32 %v1920, %v1931
      %v1944 = vadd.f32 %v1921, %v1931
      %v1945 = vadd.f32 %v1922, %v1931
      %v1946 = vadd.f32 %v1923, %v1931
      %v1947 = vadd.f32 %v1924, %v1931
      %v1948 = vadd.f32 %v1925, %v1931
      %vm1949 = vcmp.ge.f32.partialorder %v1933, 0.0
      %vm1950 = vcmp.ge.f32.partialorder %v1934, 0.0
      %vm1951 = vcmp.ge.f32.partialorder %v1935, 0.0
      %vm1952 = vcmp.ge.f32.partialorder %v1936, 0.0
      %vm1953 = vcmp.ge.f32.partialorder %v1937, 0.0
      %vm1954 = vcmp.ge.f32.partialorder %v1938, 0.0
      %vm1955 = vcmp.ge.f32.partialorder %v1939, 0.0
      %vm1956 = vcmp.ge.f32.partialorder %v1940, 0.0
      %vm1957 = vcmp.ge.f32.partialorder %v1941, 0.0
      %vm1958 = vcmp.ge.f32.partialorder %v1942, 0.0
      %vm1959 = vcmp.ge.f32.partialorder %v1943, 0.0
      %vm1960 = vcmp.ge.f32.partialorder %v1944, 0.0
      %vm1961 = vcmp.ge.f32.partialorder %v1945, 0.0
      %vm1962 = vcmp.ge.f32.partialorder %v1946, 0.0
      %vm1963 = vcmp.ge.f32.partialorder %v1947, 0.0
      %vm1964 = vcmp.ge.f32.partialorder %v1948, 0.0
      %v1965 = vmul.f32 %v1933, 0.01
      %v1966 = vmul.f32 %v1934, 0.01
      %v1967 = vmul.f32 %v1935, 0.01
      %v1968 = vmul.f32 %v1936, 0.01
      %v1969 = vmul.f32 %v1937, 0.01
      %v1970 = vmul.f32 %v1938, 0.01
      %v1971 = vmul.f32 %v1939, 0.01
      %v1972 = vmul.f32 %v1940, 0.01
      %v1973 = vmul.f32 %v1941, 0.01
      %v1974 = vmul.f32 %v1942, 0.01
      %v1975 = vmul.f32 %v1943, 0.01
      %v1976 = vmul.f32 %v1944, 0.01
      %v1977 = vmul.f32 %v1945, 0.01
      %v1978 = vmul.f32 %v1946, 0.01
      %v1979 = vmul.f32 %v1947, 0.01
      %v1980 = vmul.f32 %v1948, 0.01
      %v1981 = vsel %vm1949, %v1933, %v1965
      %v1982 = vsel %vm1950, %v1934, %v1966
      %v1983 = vsel %vm1951, %v1935, %v1967
      %v1984 = vsel %vm1952, %v1936, %v1968
      %v1985 = vsel %vm1953, %v1937, %v1969
      %v1986 = vsel %vm1954, %v1938, %v1970
      %v1987 = vsel %vm1955, %v1939, %v1971
      %v1988 = vsel %vm1956, %v1940, %v1972
      %v1989 = vsel %vm1957, %v1941, %v1973
      %v1990 = vsel %vm1958, %v1942, %v1974
      %v1991 = vsel %vm1959, %v1943, %v1975
      %v1992 = vsel %vm1960, %v1944, %v1976
      %v1993 = vsel %vm1961, %v1945, %v1977
      %v1994 = vsel %vm1962, %v1946, %v1978
      %v1995 = vsel %vm1963, %v1947, %v1979
      %v1996 = vsel %vm1964, %v1948, %v1980
      %1997 = vst.msk [vmem:[%s278] sm:$0xff] %vm1283, %v1981
      %1998 = vst.msk [vmem:[%s278 + $0x8] sm:$0xff] %vm1283, %v1982
      %1999 = vst.msk [vmem:[%s278 + $0x10] sm:$0xff] %vm1283, %v1983
      %2000 = vst.msk [vmem:[%s278 + $0x18] sm:$0xff] %vm1283, %v1984
      %2001 = vst.msk [vmem:[%s278 + $0x20] sm:$0xff] %vm1283, %v1985
      %2002 = vst.msk [vmem:[%s278 + $0x28] sm:$0xff] %vm1283, %v1986
      %2003 = vst.msk [vmem:[%s278 + $0x30] sm:$0xff] %vm1283, %v1987
      %2004 = vst.msk [vmem:[%s278 + $0x38] sm:$0xff] %vm1283, %v1988
      %2005 = vst.msk [vmem:[%s278 + $0x40] sm:$0xff] %vm1283, %v1989
      %2006 = vst.msk [vmem:[%s278 + $0x48] sm:$0xff] %vm1283, %v1990
      %2007 = vst.msk [vmem:[%s278 + $0x50] sm:$0xff] %vm1283, %v1991
      %2008 = vst.msk [vmem:[%s278 + $0x58] sm:$0xff] %vm1283, %v1992
      %2009 = vst.msk [vmem:[%s278 + $0x60] sm:$0xff] %vm1283, %v1993
      %2010 = vst.msk [vmem:[%s278 + $0x68] sm:$0xff] %vm1283, %v1994
      %2011 = vst.msk [vmem:[%s278 + $0x70] sm:$0xff] %vm1283, %v1995
      %2012 = vst.msk [vmem:[%s278 + $0x78] sm:$0xff] %vm1283, %v1996
      %p2013 = scmp.lt.s32.totalorder %s18, 1
      %s2014 = scalar_select %p2013, %s18, 1
      %s2015 = smul.addr %s2014, 16
      %s2016 = smul.addr %s2015, 8
      %s2017 = scalar_lea.vmem %s7, %s2016
      // Predicated region
      $region49: #{downblock_forward.1} parent=47 // pred_check
        %p2018 = pneg %p188
      $region50: #{downblock_forward.1} parent=47 // pred_check_branch
        %2020 = sbr.rel (%p2018) target = $region52
      $region51: #{downblock_forward.1} parent=47 // pred_region
        _
      $region52: #{downblock_forward.1} parent=47 // pred_fallthru
        _
    $region48: #{downblock_forward.1} parent=5 // pred_fallthru
      _
    %p2021 = scmp.le.s32.totalorder 2, %s13
    // Predicated region
    $region53: #{downblock_forward.1} parent=5 // pred_check
      %p2022 = pneg %p2021
    $region54: #{downblock_forward.1} parent=5 // pred_check_branch
      %2024 = sbr.rel (%p2022) target = $region56
    $region55: #{downblock_forward.1} parent=5 // pred_region
      %s2025 = ssub.s32 %s13, 2
      // Predicated region
      $region57: #{downblock_forward.1} parent=55 // pred_check
        %p2026 = pneg %p194
      $region58: #{downblock_forward.1} parent=55 // pred_check_branch
        %2028 = sbr.rel (%p2026) target = $region60
      $region59: #{downblock_forward.1} parent=55 // pred_region
        %p2029 = scmp.lt.s32.totalorder %s19, 1
        %s2030 = scalar_select %p2029, %s19, 1
        %s2031 = smul.addr %s2030, 16
        %s2032 = smul.addr %s2031, 8
        %s2033 = scalar_lea.vmem %s7, %s2032
      $region60: #{downblock_forward.1} parent=55 // pred_fallthru
        _
    $region56: #{downblock_forward.1} parent=5 // pred_fallthru
      _
  $region6: #{downblock_forward.1} parent=0 // loop_footer
    %s17 = sadd.s32 1, %s13
  $region7: #{downblock_forward.1} parent=0 // loop_footer_branch
    %12 = sbr.rel target = $region3
  $region8: #{downblock_forward.1} parent=0 // loop_exit
    _

</llo_original>
